<compile_context>
chip_gen: v6e
topology: v6e:2x2x1
jax: 0.10.0
libtpu: 0.0.40
codegen_flags: <defaults>
</compile_context>

<pallas_src>
import functools

import jax
import jax.numpy as jnp
from jax.experimental import pallas as pl
from jax.experimental.pallas import tpu as pltpu


def gru_net_kernel(BC, T, H,
                   x_ref, wi3_ref, wh3_ref, bi3_ref, bhn_ref,
                   wout_ref, bout_ref,
                   out_ref,
                   gi_s, hall_s):
    """GRU recurrence + Linear + log_softmax for one padded batch chunk."""
    N = x_ref.shape[-1]
    Op = out_ref.shape[-1]

    # ---- Batched, time-independent input projection: ONE (T*BC, N)@(N, 3H)
    #      MXU matmul with the fused per-gate bias row. ----
    x = x_ref[...].reshape(T * BC, N)                         # bf16
    gi_s[...] = (jnp.dot(x, wi3_ref[...], preferred_element_type=jnp.float32)
                 + bi3_ref[...])                              # (T*BC, 3H) f32

    # Hoist recurrent weight / bias loads out of the loop.
    wh3 = wh3_ref[...]                                        # (H, 3H) bf16
    bhn = bhn_ref[...]                                        # (1, H)  f32

    # ---- Sequential recurrence: ONE fused (BC,H)@(H,3H) matmul per step ----
    def step(t, h):
        row = pl.multiple_of(t * BC, BC)
        gi = gi_s[pl.ds(row, BC), :]                          # (BC, 3H) f32
        gh = jnp.dot(h.astype(wh3.dtype), wh3,
                     preferred_element_type=jnp.float32)      # (BC, 3H) f32

        r = jax.nn.sigmoid(gi[:, 0:H] + gh[:, 0:H])
        z = jax.nn.sigmoid(gi[:, H:2 * H] + gh[:, H:2 * H])
        n = jnp.tanh(gi[:, 2 * H:3 * H] + r * (gh[:, 2 * H:3 * H] + bhn))
        h_new = (1.0 - z) * n + z * h                         # all f32

        hall_s[pl.ds(row, BC), :] = h_new
        return h_new

    h0 = jnp.zeros((BC, H), jnp.float32)
    jax.lax.fori_loop(0, T, step, h0, unroll=min(T, 8))

    # ---- Batched output projection + log_softmax (lane-dense, Op = 128k) ----
    h_all = hall_s[...].astype(wout_ref.dtype)                # (T*BC, H) bf16
    logits = (jnp.dot(h_all, wout_ref[...], preferred_element_type=jnp.float32)
              + bout_ref[...])                                # (T*BC, Op) f32
    m = jnp.max(logits, axis=-1, keepdims=True)
    shifted = logits - m
    lse = jnp.log(jnp.sum(jnp.exp(shifted), axis=-1, keepdims=True))
    out_ref[...] = (shifted - lse).reshape(T, BC, Op).astype(out_ref.dtype)


def net_forward(x, params):
    """x: (T, B, n_input) f32, seq-first like nn.GRU. Returns (T*B, n_output) log-probs."""
    w_ih, w_hh, b_ih, b_hh, w_out, b_out = params
    T, B, N = x.shape
    H = w_hh.shape[1]
    O = w_out.shape[0]
    H3 = 3 * H

    # Pad the batch (sublane dim) to a multiple of 8; when B > 8 pad to a
    # multiple of 16 and use two chunks so the "parallel" grid axis can be
    # split across the 2 TensorCores of a v7x chip.
    if B <= 8:
        Bp = 8
    else:
        Bp = ((B + 15) // 16) * 16
    BC = Bp if Bp <= 8 else Bp // 2
    n_chunks = Bp // BC

    if Bp != B:
        x = jnp.pad(x, ((0, 0), (0, Bp - B), (0, 0)))
    x = x.astype(jnp.bfloat16)                                # (T, Bp, N)

    # Fused [r|z|n] weights, pre-transposed for (rows, in) @ (in, 3H) matmuls.
    # PyTorch stacks gates along dim 0 of w_ih/w_hh, so a plain transpose gives
    # the [r|z|n] column layout directly.
    wi3 = w_ih.T.astype(jnp.bfloat16)                         # (N, 3H)
    wh3 = w_hh.T.astype(jnp.bfloat16)                         # (H, 3H)

    b_ir, b_iz, b_in_ = jnp.split(b_ih, 3)
    b_hr, b_hz, b_hn = jnp.split(b_hh, 3)
    bi3 = jnp.concatenate([b_ir + b_hr, b_iz + b_hz, b_in_]
                          ).reshape(1, H3).astype(jnp.float32)
    bhn = b_hn.reshape(1, H).astype(jnp.float32)              # gated by r in tanh

    # Lane-dense output: pad the class dim up to a multiple of 128. Padded
    # columns get zero weights and a -1e30 bias -> exp() underflows to 0, so
    # the log_softmax over the full 128 lanes equals the 9-class one.
    Op = max(128, ((O + 127) // 128) * 128)
    wout = jnp.pad(w_out.T, ((0, 0), (0, Op - O))).astype(jnp.bfloat16)   # (H, Op)
    bout = jnp.concatenate([b_out.astype(jnp.float32),
                            jnp.full((Op - O,), -1e30, jnp.float32)]
                           ).reshape(1, Op)

    # VMEM budget from the actual resident buffers (double-buffered I/O blocks
    # + weights + scratch), capped at 64 MiB so it is valid on v7x too.
    bytes_io = 2 * (T * BC * N * 2 + T * BC * Op * 4)
    bytes_w = 2 * ((N * H3 + H * H3 + H * Op) * 2 + (H3 + H + Op) * 4)
    bytes_scratch = T * BC * (H3 + H) * 4
    vmem_limit = int(min(max(bytes_io + bytes_w + bytes_scratch + (4 << 20),
                             8 << 20), 64 << 20))

    kernel = functools.partial(gru_net_kernel, BC, T, H)
    out = pl.pallas_call(
        kernel,
        out_shape=jax.ShapeDtypeStruct((T, Bp, Op), jnp.float32),
        grid=(n_chunks,),
        in_specs=[
            pl.BlockSpec((T, BC, N), lambda b: (0, b, 0)),    # x (batch chunk)
            pl.BlockSpec((N, H3), lambda b: (0, 0)),          # wi3
            pl.BlockSpec((H, H3), lambda b: (0, 0)),          # wh3
            pl.BlockSpec((1, H3), lambda b: (0, 0)),          # bi3
            pl.BlockSpec((1, H), lambda b: (0, 0)),           # bhn
            pl.BlockSpec((H, Op), lambda b: (0, 0)),          # wout (padded)
            pl.BlockSpec((1, Op), lambda b: (0, 0)),          # bout (padded)
        ],
        out_specs=pl.BlockSpec((T, BC, Op), lambda b: (0, b, 0)),
        scratch_shapes=[
            pltpu.VMEM((T * BC, H3), jnp.float32),            # fused input gates
            pltpu.VMEM((T * BC, H), jnp.float32),             # all hidden states
        ],
        compiler_params=pltpu.CompilerParams(
            dimension_semantics=("parallel",),
            vmem_limit_bytes=vmem_limit),
    )(x, wi3, wh3, bi3, bhn, wout, bout)

    # Drop batch padding and padded class lanes; flatten like .view(-1, 9).
    return out[:, :B, :O].reshape(T * B, O)


def net_forward_ref(x, params):
    """Pure-JAX f32 reference (PyTorch GRU + Linear + log_softmax semantics)."""
    w_ih, w_hh, b_ih, b_hh, w_out, b_out = params
    H = w_hh.shape[1]

    def cell(h, xt):
        gi = xt @ w_ih.T + b_ih
        gh = h @ w_hh.T + b_hh
        i_r, i_z, i_n = jnp.split(gi, 3, axis=-1)
        h_r, h_z, h_n = jnp.split(gh, 3, axis=-1)
        r = jax.nn.sigmoid(i_r + h_r)
        z = jax.nn.sigmoid(i_z + h_z)
        n = jnp.tanh(i_n + r * h_n)
        h_new = (1.0 - z) * n + z * h
        return h_new, h_new

    h0 = jnp.zeros((x.shape[1], H), jnp.float32)
    _, hs = jax.lax.scan(cell, h0, x)
    logits = hs @ w_out.T + b_out
    return jax.nn.log_softmax(logits, axis=-1).reshape(-1, w_out.shape[0])


def init_params(key, n_input, hidden_size, n_output):
    """Deterministic init mirroring PyTorch default GRU / Linear init shapes."""
    k = jax.random.split(key, 6)
    s = 1.0 / jnp.sqrt(hidden_size)
    w_ih = jax.random.uniform(k[0], (3 * hidden_size, n_input), jnp.float32, -s, s)
    w_hh = jax.random.uniform(k[1], (3 * hidden_size, hidden_size), jnp.float32, -s, s)
    b_ih = jax.random.uniform(k[2], (3 * hidden_size,), jnp.float32, -s, s)
    b_hh = jax.random.uniform(k[3], (3 * hidden_size,), jnp.float32, -s, s)
    w_out = jax.random.uniform(k[4], (n_output, hidden_size), jnp.float32, -s, s)
    b_out = jax.random.uniform(k[5], (n_output,), jnp.float32, -s, s)
    return (w_ih, w_hh, b_ih, b_hh, w_out, b_out)


if __name__ == "__main__":
    # Small shapes consistent with the copying task: 9 output classes (view(-1, 9)).
    T, B, N, H, O = 8, 4, 10, 32, 9
    key = jax.random.PRNGKey(0)
    kx, kp = jax.random.split(key)
    x = jax.random.normal(kx, (T, B, N), jnp.float32)
    params = init_params(kp, N, H, O)

    out = net_forward(x, params)
    out = jax.block_until_ready(out)
    assert out.shape == (T * B, O), out.shape

    # Sanity: rows of log_softmax output should (exp-)sum to ~1.
    row_sums = jnp.exp(out).sum(axis=-1)
    assert bool(jnp.all(jnp.abs(row_sums - 1.0) < 1e-4))

    # Numerical check vs. f32 reference (bf16 MXU operands -> loose tolerance).
    ref = net_forward_ref(x, params)
    assert bool(jnp.max(jnp.abs(out - ref)) < 7.5e-2)

    print("KERNEL_OK")
</pallas_src>

<mosaic_0001>
module attributes {stable_mosaic.version = 11 : i64} {
  func.func @gru_net_kernel(%arg0: i32, %arg1: memref<8x8x10xbf16, #tpu.memory_space<vmem>>, %arg2: memref<10x96xbf16, #tpu.memory_space<vmem>>, %arg3: memref<32x96xbf16, #tpu.memory_space<vmem>>, %arg4: memref<1x96xf32, #tpu.memory_space<vmem>>, %arg5: memref<1x32xf32, #tpu.memory_space<vmem>>, %arg6: memref<32x128xbf16, #tpu.memory_space<vmem>>, %arg7: memref<1x128xf32, #tpu.memory_space<vmem>>, %arg8: memref<8x8x128xf32, #tpu.memory_space<vmem>>, %arg9: memref<64x96xf32, #tpu.memory_space<vmem>>, %arg10: memref<64x32xf32, #tpu.memory_space<vmem>>) attributes {dimension_semantics = [#tpu.dimension_semantics<parallel>], iteration_bounds = array<i64: 1>, scalar_prefetch = 0 : i64, scratch_operands = 2 : i64, tpu.core_type = #tpu.core_type<tc>, window_params = [{transform_indices = @transform_0, window_bounds = array<i64: 8, 8, 10>}, {pipeline_mode = #tpu.pipeline_mode<synchronous>, transform_indices = @transform_1, window_bounds = array<i64: 10, 96>}, {pipeline_mode = #tpu.pipeline_mode<synchronous>, transform_indices = @transform_2, window_bounds = array<i64: 32, 96>}, {pipeline_mode = #tpu.pipeline_mode<synchronous>, transform_indices = @transform_3, window_bounds = array<i64: 1, 96>}, {pipeline_mode = #tpu.pipeline_mode<synchronous>, transform_indices = @transform_4, window_bounds = array<i64: 1, 32>}, {pipeline_mode = #tpu.pipeline_mode<synchronous>, transform_indices = @transform_5, window_bounds = array<i64: 32, 128>}, {pipeline_mode = #tpu.pipeline_mode<synchronous>, transform_indices = @transform_6, window_bounds = array<i64: 1, 128>}, {transform_indices = @transform_7, window_bounds = array<i64: 8, 8, 128>}]} {
    %c0 = arith.constant 0 : index
    %c0_0 = arith.constant 0 : index
    %c0_1 = arith.constant 0 : index
    %0 = vector.load %arg1[%c0, %c0_0, %c0_1] : memref<8x8x10xbf16, #tpu.memory_space<vmem>>, vector<8x8x10xbf16>
    %1 = vector.shape_cast %0 : vector<8x8x10xbf16> to vector<64x10xbf16>
    %c0_2 = arith.constant 0 : index
    %c0_3 = arith.constant 0 : index
    %2 = vector.load %arg2[%c0_2, %c0_3] : memref<10x96xbf16, #tpu.memory_space<vmem>>, vector<10x96xbf16>
    %cst = arith.constant dense<0.000000e+00> : vector<64x96xf32>
    %3 = tpu.matmul %1, %2, %cst {dimension_numbers = #tpu.dot_dimension_numbers<[1], [0], [0], [1], [0, 0, 1, 1], [], []>} : vector<64x10xbf16>, vector<10x96xbf16>, vector<64x96xf32> -> vector<64x96xf32>
    %c0_4 = arith.constant 0 : index
    %c0_5 = arith.constant 0 : index
    %4 = vector.load %arg4[%c0_4, %c0_5] : memref<1x96xf32, #tpu.memory_space<vmem>>, vector<1x96xf32>
    %5 = vector.broadcast %4 : vector<1x96xf32> to vector<64x96xf32>
    %6 = arith.addf %3, %5 : vector<64x96xf32>
    %c0_6 = arith.constant 0 : index
    %c0_7 = arith.constant 0 : index
    %7 = vector.load %arg9[%c0_6, %c0_7] : memref<64x96xf32, #tpu.memory_space<vmem>>, vector<64x96xf32>
    tpu.vector_store %arg9[%c0_6, %c0_7], %6 {strides = array<i32>} : memref<64x96xf32, #tpu.memory_space<vmem>>, vector<64x96xf32>,
    %c0_8 = arith.constant 0 : index
    %c0_9 = arith.constant 0 : index
    %8 = vector.load %arg3[%c0_8, %c0_9] : memref<32x96xbf16, #tpu.memory_space<vmem>>, vector<32x96xbf16>
    %c0_10 = arith.constant 0 : index
    %c0_11 = arith.constant 0 : index
    %9 = vector.load %arg5[%c0_10, %c0_11] : memref<1x32xf32, #tpu.memory_space<vmem>>, vector<1x32xf32>
    %cst_12 = arith.constant 0.000000e+00 : f32
    %10 = vector.broadcast %cst_12 : f32 to vector<8x32xf32>
    %c0_i32 = arith.constant 0 : i32
    %c8_i32 = arith.constant 8 : i32
    %11 = arith.muli %c0_i32, %c8_i32 : i32
    %12 = tpu.assume_multiple %11, 8 : i32
    %13 = arith.index_cast %12 : i32 to index
    %c0_13 = arith.constant 0 : index
    %14 = vector.load %arg9[%13, %c0_13] : memref<64x96xf32, #tpu.memory_space<vmem>>, vector<8x96xf32>
    %15 = arith.truncf %10 : vector<8x32xf32> to vector<8x32xbf16>
    %cst_14 = arith.constant dense<0.000000e+00> : vector<8x96xf32>
    %16 = tpu.matmul %15, %8, %cst_14 {dimension_numbers = #tpu.dot_dimension_numbers<[1], [0], [0], [1], [0, 0, 1, 1], [], []>} : vector<8x32xbf16>, vector<32x96xbf16>, vector<8x96xf32> -> vector<8x96xf32>
    %17 = vector.extract_strided_slice %14 {offsets = [0, 0], sizes = [8, 32], strides = [1, 1]} : vector<8x96xf32> to vector<8x32xf32>
    %18 = vector.extract_strided_slice %16 {offsets = [0, 0], sizes = [8, 32], strides = [1, 1]} : vector<8x96xf32> to vector<8x32xf32>
    %19 = arith.addf %17, %18 : vector<8x32xf32>
    %20 = arith.negf %19 : vector<8x32xf32>
    %21 = math.exp %20 : vector<8x32xf32>
    %cst_15 = arith.constant 1.000000e+00 : f32
    %22 = vector.broadcast %cst_15 : f32 to vector<8x32xf32>
    %23 = arith.addf %22, %21 : vector<8x32xf32>
    %24 = arith.divf %22, %23 : vector<8x32xf32>
    %25 = vector.extract_strided_slice %14 {offsets = [0, 32], sizes = [8, 32], strides = [1, 1]} : vector<8x96xf32> to vector<8x32xf32>
    %26 = vector.extract_strided_slice %16 {offsets = [0, 32], sizes = [8, 32], strides = [1, 1]} : vector<8x96xf32> to vector<8x32xf32>
    %27 = arith.addf %25, %26 : vector<8x32xf32>
    %28 = arith.negf %27 : vector<8x32xf32>
    %29 = math.exp %28 : vector<8x32xf32>
    %cst_16 = arith.constant 1.000000e+00 : f32
    %30 = vector.broadcast %cst_16 : f32 to vector<8x32xf32>
    %31 = arith.addf %30, %29 : vector<8x32xf32>
    %32 = arith.divf %30, %31 : vector<8x32xf32>
    %33 = vector.extract_strided_slice %14 {offsets = [0, 64], sizes = [8, 32], strides = [1, 1]} : vector<8x96xf32> to vector<8x32xf32>
    %34 = vector.extract_strided_slice %16 {offsets = [0, 64], sizes = [8, 32], strides = [1, 1]} : vector<8x96xf32> to vector<8x32xf32>
    %35 = vector.broadcast %9 : vector<1x32xf32> to vector<8x32xf32>
    %36 = arith.addf %34, %35 : vector<8x32xf32>
    %37 = arith.mulf %24, %36 : vector<8x32xf32>
    %38 = arith.addf %33, %37 : vector<8x32xf32>
    %39 = math.tanh %38 : vector<8x32xf32>
    %cst_17 = arith.constant 1.000000e+00 : f32
    %40 = vector.broadcast %cst_17 : f32 to vector<8x32xf32>
    %41 = arith.subf %40, %32 : vector<8x32xf32>
    %42 = arith.mulf %41, %39 : vector<8x32xf32>
    %43 = arith.mulf %32, %10 : vector<8x32xf32>
    %44 = arith.addf %42, %43 : vector<8x32xf32>
    %45 = arith.index_cast %12 : i32 to index
    %c0_18 = arith.constant 0 : index
    %46 = vector.load %arg10[%45, %c0_18] : memref<64x32xf32, #tpu.memory_space<vmem>>, vector<8x32xf32>
    tpu.vector_store %arg10[%45, %c0_18], %44 {strides = array<i32>} : memref<64x32xf32, #tpu.memory_space<vmem>>, vector<8x32xf32>,
    %c1_i32 = arith.constant 1 : i32
    %c8_i32_19 = arith.constant 8 : i32
    %47 = arith.muli %c1_i32, %c8_i32_19 : i32
    %48 = tpu.assume_multiple %47, 8 : i32
    %49 = arith.index_cast %48 : i32 to index
    %c0_20 = arith.constant 0 : index
    %50 = vector.load %arg9[%49, %c0_20] : memref<64x96xf32, #tpu.memory_space<vmem>>, vector<8x96xf32>
    %51 = arith.truncf %44 : vector<8x32xf32> to vector<8x32xbf16>
    %cst_21 = arith.constant dense<0.000000e+00> : vector<8x96xf32>
    %52 = tpu.matmul %51, %8, %cst_21 {dimension_numbers = #tpu.dot_dimension_numbers<[1], [0], [0], [1], [0, 0, 1, 1], [], []>} : vector<8x32xbf16>, vector<32x96xbf16>, vector<8x96xf32> -> vector<8x96xf32>
    %53 = vector.extract_strided_slice %50 {offsets = [0, 0], sizes = [8, 32], strides = [1, 1]} : vector<8x96xf32> to vector<8x32xf32>
    %54 = vector.extract_strided_slice %52 {offsets = [0, 0], sizes = [8, 32], strides = [1, 1]} : vector<8x96xf32> to vector<8x32xf32>
    %55 = arith.addf %53, %54 : vector<8x32xf32>
    %56 = arith.negf %55 : vector<8x32xf32>
    %57 = math.exp %56 : vector<8x32xf32>
    %cst_22 = arith.constant 1.000000e+00 : f32
    %58 = vector.broadcast %cst_22 : f32 to vector<8x32xf32>
    %59 = arith.addf %58, %57 : vector<8x32xf32>
    %60 = arith.divf %58, %59 : vector<8x32xf32>
    %61 = vector.extract_strided_slice %50 {offsets = [0, 32], sizes = [8, 32], strides = [1, 1]} : vector<8x96xf32> to vector<8x32xf32>
    %62 = vector.extract_strided_slice %52 {offsets = [0, 32], sizes = [8, 32], strides = [1, 1]} : vector<8x96xf32> to vector<8x32xf32>
    %63 = arith.addf %61, %62 : vector<8x32xf32>
    %64 = arith.negf %63 : vector<8x32xf32>
    %65 = math.exp %64 : vector<8x32xf32>
    %cst_23 = arith.constant 1.000000e+00 : f32
    %66 = vector.broadcast %cst_23 : f32 to vector<8x32xf32>
    %67 = arith.addf %66, %65 : vector<8x32xf32>
    %68 = arith.divf %66, %67 : vector<8x32xf32>
    %69 = vector.extract_strided_slice %50 {offsets = [0, 64], sizes = [8, 32], strides = [1, 1]} : vector<8x96xf32> to vector<8x32xf32>
    %70 = vector.extract_strided_slice %52 {offsets = [0, 64], sizes = [8, 32], strides = [1, 1]} : vector<8x96xf32> to vector<8x32xf32>
    %71 = vector.broadcast %9 : vector<1x32xf32> to vector<8x32xf32>
    %72 = arith.addf %70, %71 : vector<8x32xf32>
    %73 = arith.mulf %60, %72 : vector<8x32xf32>
    %74 = arith.addf %69, %73 : vector<8x32xf32>
    %75 = math.tanh %74 : vector<8x32xf32>
    %cst_24 = arith.constant 1.000000e+00 : f32
    %76 = vector.broadcast %cst_24 : f32 to vector<8x32xf32>
    %77 = arith.subf %76, %68 : vector<8x32xf32>
    %78 = arith.mulf %77, %75 : vector<8x32xf32>
    %79 = arith.mulf %68, %44 : vector<8x32xf32>
    %80 = arith.addf %78, %79 : vector<8x32xf32>
    %81 = arith.index_cast %48 : i32 to index
    %c0_25 = arith.constant 0 : index
    %82 = vector.load %arg10[%81, %c0_25] : memref<64x32xf32, #tpu.memory_space<vmem>>, vector<8x32xf32>
    tpu.vector_store %arg10[%81, %c0_25], %80 {strides = array<i32>} : memref<64x32xf32, #tpu.memory_space<vmem>>, vector<8x32xf32>,
    %c2_i32 = arith.constant 2 : i32
    %c8_i32_26 = arith.constant 8 : i32
    %83 = arith.muli %c2_i32, %c8_i32_26 : i32
    %84 = tpu.assume_multiple %83, 8 : i32
    %85 = arith.index_cast %84 : i32 to index
    %c0_27 = arith.constant 0 : index
    %86 = vector.load %arg9[%85, %c0_27] : memref<64x96xf32, #tpu.memory_space<vmem>>, vector<8x96xf32>
    %87 = arith.truncf %80 : vector<8x32xf32> to vector<8x32xbf16>
    %cst_28 = arith.constant dense<0.000000e+00> : vector<8x96xf32>
    %88 = tpu.matmul %87, %8, %cst_28 {dimension_numbers = #tpu.dot_dimension_numbers<[1], [0], [0], [1], [0, 0, 1, 1], [], []>} : vector<8x32xbf16>, vector<32x96xbf16>, vector<8x96xf32> -> vector<8x96xf32>
    %89 = vector.extract_strided_slice %86 {offsets = [0, 0], sizes = [8, 32], strides = [1, 1]} : vector<8x96xf32> to vector<8x32xf32>
    %90 = vector.extract_strided_slice %88 {offsets = [0, 0], sizes = [8, 32], strides = [1, 1]} : vector<8x96xf32> to vector<8x32xf32>
    %91 = arith.addf %89, %90 : vector<8x32xf32>
    %92 = arith.negf %91 : vector<8x32xf32>
    %93 = math.exp %92 : vector<8x32xf32>
    %cst_29 = arith.constant 1.000000e+00 : f32
    %94 = vector.broadcast %cst_29 : f32 to vector<8x32xf32>
    %95 = arith.addf %94, %93 : vector<8x32xf32>
    %96 = arith.divf %94, %95 : vector<8x32xf32>
    %97 = vector.extract_strided_slice %86 {offsets = [0, 32], sizes = [8, 32], strides = [1, 1]} : vector<8x96xf32> to vector<8x32xf32>
    %98 = vector.extract_strided_slice %88 {offsets = [0, 32], sizes = [8, 32], strides = [1, 1]} : vector<8x96xf32> to vector<8x32xf32>
    %99 = arith.addf %97, %98 : vector<8x32xf32>
    %100 = arith.negf %99 : vector<8x32xf32>
    %101 = math.exp %100 : vector<8x32xf32>
    %cst_30 = arith.constant 1.000000e+00 : f32
    %102 = vector.broadcast %cst_30 : f32 to vector<8x32xf32>
    %103 = arith.addf %102, %101 : vector<8x32xf32>
    %104 = arith.divf %102, %103 : vector<8x32xf32>
    %105 = vector.extract_strided_slice %86 {offsets = [0, 64], sizes = [8, 32], strides = [1, 1]} : vector<8x96xf32> to vector<8x32xf32>
    %106 = vector.extract_strided_slice %88 {offsets = [0, 64], sizes = [8, 32], strides = [1, 1]} : vector<8x96xf32> to vector<8x32xf32>
    %107 = vector.broadcast %9 : vector<1x32xf32> to vector<8x32xf32>
    %108 = arith.addf %106, %107 : vector<8x32xf32>
    %109 = arith.mulf %96, %108 : vector<8x32xf32>
    %110 = arith.addf %105, %109 : vector<8x32xf32>
    %111 = math.tanh %110 : vector<8x32xf32>
    %cst_31 = arith.constant 1.000000e+00 : f32
    %112 = vector.broadcast %cst_31 : f32 to vector<8x32xf32>
    %113 = arith.subf %112, %104 : vector<8x32xf32>
    %114 = arith.mulf %113, %111 : vector<8x32xf32>
    %115 = arith.mulf %104, %80 : vector<8x32xf32>
    %116 = arith.addf %114, %115 : vector<8x32xf32>
    %117 = arith.index_cast %84 : i32 to index
    %c0_32 = arith.constant 0 : index
    %118 = vector.load %arg10[%117, %c0_32] : memref<64x32xf32, #tpu.memory_space<vmem>>, vector<8x32xf32>
    tpu.vector_store %arg10[%117, %c0_32], %116 {strides = array<i32>} : memref<64x32xf32, #tpu.memory_space<vmem>>, vector<8x32xf32>,
    %c3_i32 = arith.constant 3 : i32
    %c8_i32_33 = arith.constant 8 : i32
    %119 = arith.muli %c3_i32, %c8_i32_33 : i32
    %120 = tpu.assume_multiple %119, 8 : i32
    %121 = arith.index_cast %120 : i32 to index
    %c0_34 = arith.constant 0 : index
    %122 = vector.load %arg9[%121, %c0_34] : memref<64x96xf32, #tpu.memory_space<vmem>>, vector<8x96xf32>
    %123 = arith.truncf %116 : vector<8x32xf32> to vector<8x32xbf16>
    %cst_35 = arith.constant dense<0.000000e+00> : vector<8x96xf32>
    %124 = tpu.matmul %123, %8, %cst_35 {dimension_numbers = #tpu.dot_dimension_numbers<[1], [0], [0], [1], [0, 0, 1, 1], [], []>} : vector<8x32xbf16>, vector<32x96xbf16>, vector<8x96xf32> -> vector<8x96xf32>
    %125 = vector.extract_strided_slice %122 {offsets = [0, 0], sizes = [8, 32], strides = [1, 1]} : vector<8x96xf32> to vector<8x32xf32>
    %126 = vector.extract_strided_slice %124 {offsets = [0, 0], sizes = [8, 32], strides = [1, 1]} : vector<8x96xf32> to vector<8x32xf32>
    %127 = arith.addf %125, %126 : vector<8x32xf32>
    %128 = arith.negf %127 : vector<8x32xf32>
    %129 = math.exp %128 : vector<8x32xf32>
    %cst_36 = arith.constant 1.000000e+00 : f32
    %130 = vector.broadcast %cst_36 : f32 to vector<8x32xf32>
    %131 = arith.addf %130, %129 : vector<8x32xf32>
    %132 = arith.divf %130, %131 : vector<8x32xf32>
    %133 = vector.extract_strided_slice %122 {offsets = [0, 32], sizes = [8, 32], strides = [1, 1]} : vector<8x96xf32> to vector<8x32xf32>
    %134 = vector.extract_strided_slice %124 {offsets = [0, 32], sizes = [8, 32], strides = [1, 1]} : vector<8x96xf32> to vector<8x32xf32>
    %135 = arith.addf %133, %134 : vector<8x32xf32>
    %136 = arith.negf %135 : vector<8x32xf32>
    %137 = math.exp %136 : vector<8x32xf32>
    %cst_37 = arith.constant 1.000000e+00 : f32
    %138 = vector.broadcast %cst_37 : f32 to vector<8x32xf32>
    %139 = arith.addf %138, %137 : vector<8x32xf32>
    %140 = arith.divf %138, %139 : vector<8x32xf32>
    %141 = vector.extract_strided_slice %122 {offsets = [0, 64], sizes = [8, 32], strides = [1, 1]} : vector<8x96xf32> to vector<8x32xf32>
    %142 = vector.extract_strided_slice %124 {offsets = [0, 64], sizes = [8, 32], strides = [1, 1]} : vector<8x96xf32> to vector<8x32xf32>
    %143 = vector.broadcast %9 : vector<1x32xf32> to vector<8x32xf32>
    %144 = arith.addf %142, %143 : vector<8x32xf32>
    %145 = arith.mulf %132, %144 : vector<8x32xf32>
    %146 = arith.addf %141, %145 : vector<8x32xf32>
    %147 = math.tanh %146 : vector<8x32xf32>
    %cst_38 = arith.constant 1.000000e+00 : f32
    %148 = vector.broadcast %cst_38 : f32 to vector<8x32xf32>
    %149 = arith.subf %148, %140 : vector<8x32xf32>
    %150 = arith.mulf %149, %147 : vector<8x32xf32>
    %151 = arith.mulf %140, %116 : vector<8x32xf32>
    %152 = arith.addf %150, %151 : vector<8x32xf32>
    %153 = arith.index_cast %120 : i32 to index
    %c0_39 = arith.constant 0 : index
    %154 = vector.load %arg10[%153, %c0_39] : memref<64x32xf32, #tpu.memory_space<vmem>>, vector<8x32xf32>
    tpu.vector_store %arg10[%153, %c0_39], %152 {strides = array<i32>} : memref<64x32xf32, #tpu.memory_space<vmem>>, vector<8x32xf32>,
    %c4_i32 = arith.constant 4 : i32
    %c8_i32_40 = arith.constant 8 : i32
    %155 = arith.muli %c4_i32, %c8_i32_40 : i32
    %156 = tpu.assume_multiple %155, 8 : i32
    %157 = arith.index_cast %156 : i32 to index
    %c0_41 = arith.constant 0 : index
    %158 = vector.load %arg9[%157, %c0_41] : memref<64x96xf32, #tpu.memory_space<vmem>>, vector<8x96xf32>
    %159 = arith.truncf %152 : vector<8x32xf32> to vector<8x32xbf16>
    %cst_42 = arith.constant dense<0.000000e+00> : vector<8x96xf32>
    %160 = tpu.matmul %159, %8, %cst_42 {dimension_numbers = #tpu.dot_dimension_numbers<[1], [0], [0], [1], [0, 0, 1, 1], [], []>} : vector<8x32xbf16>, vector<32x96xbf16>, vector<8x96xf32> -> vector<8x96xf32>
    %161 = vector.extract_strided_slice %158 {offsets = [0, 0], sizes = [8, 32], strides = [1, 1]} : vector<8x96xf32> to vector<8x32xf32>
    %162 = vector.extract_strided_slice %160 {offsets = [0, 0], sizes = [8, 32], strides = [1, 1]} : vector<8x96xf32> to vector<8x32xf32>
    %163 = arith.addf %161, %162 : vector<8x32xf32>
    %164 = arith.negf %163 : vector<8x32xf32>
    %165 = math.exp %164 : vector<8x32xf32>
    %cst_43 = arith.constant 1.000000e+00 : f32
    %166 = vector.broadcast %cst_43 : f32 to vector<8x32xf32>
    %167 = arith.addf %166, %165 : vector<8x32xf32>
    %168 = arith.divf %166, %167 : vector<8x32xf32>
    %169 = vector.extract_strided_slice %158 {offsets = [0, 32], sizes = [8, 32], strides = [1, 1]} : vector<8x96xf32> to vector<8x32xf32>
    %170 = vector.extract_strided_slice %160 {offsets = [0, 32], sizes = [8, 32], strides = [1, 1]} : vector<8x96xf32> to vector<8x32xf32>
    %171 = arith.addf %169, %170 : vector<8x32xf32>
    %172 = arith.negf %171 : vector<8x32xf32>
    %173 = math.exp %172 : vector<8x32xf32>
    %cst_44 = arith.constant 1.000000e+00 : f32
    %174 = vector.broadcast %cst_44 : f32 to vector<8x32xf32>
    %175 = arith.addf %174, %173 : vector<8x32xf32>
    %176 = arith.divf %174, %175 : vector<8x32xf32>
    %177 = vector.extract_strided_slice %158 {offsets = [0, 64], sizes = [8, 32], strides = [1, 1]} : vector<8x96xf32> to vector<8x32xf32>
    %178 = vector.extract_strided_slice %160 {offsets = [0, 64], sizes = [8, 32], strides = [1, 1]} : vector<8x96xf32> to vector<8x32xf32>
    %179 = vector.broadcast %9 : vector<1x32xf32> to vector<8x32xf32>
    %180 = arith.addf %178, %179 : vector<8x32xf32>
    %181 = arith.mulf %168, %180 : vector<8x32xf32>
    %182 = arith.addf %177, %181 : vector<8x32xf32>
    %183 = math.tanh %182 : vector<8x32xf32>
    %cst_45 = arith.constant 1.000000e+00 : f32
    %184 = vector.broadcast %cst_45 : f32 to vector<8x32xf32>
    %185 = arith.subf %184, %176 : vector<8x32xf32>
    %186 = arith.mulf %185, %183 : vector<8x32xf32>
    %187 = arith.mulf %176, %152 : vector<8x32xf32>
    %188 = arith.addf %186, %187 : vector<8x32xf32>
    %189 = arith.index_cast %156 : i32 to index
    %c0_46 = arith.constant 0 : index
    %190 = vector.load %arg10[%189, %c0_46] : memref<64x32xf32, #tpu.memory_space<vmem>>, vector<8x32xf32>
    tpu.vector_store %arg10[%189, %c0_46], %188 {strides = array<i32>} : memref<64x32xf32, #tpu.memory_space<vmem>>, vector<8x32xf32>,
    %c5_i32 = arith.constant 5 : i32
    %c8_i32_47 = arith.constant 8 : i32
    %191 = arith.muli %c5_i32, %c8_i32_47 : i32
    %192 = tpu.assume_multiple %191, 8 : i32
    %193 = arith.index_cast %192 : i32 to index
    %c0_48 = arith.constant 0 : index
    %194 = vector.load %arg9[%193, %c0_48] : memref<64x96xf32, #tpu.memory_space<vmem>>, vector<8x96xf32>
    %195 = arith.truncf %188 : vector<8x32xf32> to vector<8x32xbf16>
    %cst_49 = arith.constant dense<0.000000e+00> : vector<8x96xf32>
    %196 = tpu.matmul %195, %8, %cst_49 {dimension_numbers = #tpu.dot_dimension_numbers<[1], [0], [0], [1], [0, 0, 1, 1], [], []>} : vector<8x32xbf16>, vector<32x96xbf16>, vector<8x96xf32> -> vector<8x96xf32>
    %197 = vector.extract_strided_slice %194 {offsets = [0, 0], sizes = [8, 32], strides = [1, 1]} : vector<8x96xf32> to vector<8x32xf32>
    %198 = vector.extract_strided_slice %196 {offsets = [0, 0], sizes = [8, 32], strides = [1, 1]} : vector<8x96xf32> to vector<8x32xf32>
    %199 = arith.addf %197, %198 : vector<8x32xf32>
    %200 = arith.negf %199 : vector<8x32xf32>
    %201 = math.exp %200 : vector<8x32xf32>
    %cst_50 = arith.constant 1.000000e+00 : f32
    %202 = vector.broadcast %cst_50 : f32 to vector<8x32xf32>
    %203 = arith.addf %202, %201 : vector<8x32xf32>
    %204 = arith.divf %202, %203 : vector<8x32xf32>
    %205 = vector.extract_strided_slice %194 {offsets = [0, 32], sizes = [8, 32], strides = [1, 1]} : vector<8x96xf32> to vector<8x32xf32>
    %206 = vector.extract_strided_slice %196 {offsets = [0, 32], sizes = [8, 32], strides = [1, 1]} : vector<8x96xf32> to vector<8x32xf32>
    %207 = arith.addf %205, %206 : vector<8x32xf32>
    %208 = arith.negf %207 : vector<8x32xf32>
    %209 = math.exp %208 : vector<8x32xf32>
    %cst_51 = arith.constant 1.000000e+00 : f32
    %210 = vector.broadcast %cst_51 : f32 to vector<8x32xf32>
    %211 = arith.addf %210, %209 : vector<8x32xf32>
    %212 = arith.divf %210, %211 : vector<8x32xf32>
    %213 = vector.extract_strided_slice %194 {offsets = [0, 64], sizes = [8, 32], strides = [1, 1]} : vector<8x96xf32> to vector<8x32xf32>
    %214 = vector.extract_strided_slice %196 {offsets = [0, 64], sizes = [8, 32], strides = [1, 1]} : vector<8x96xf32> to vector<8x32xf32>
    %215 = vector.broadcast %9 : vector<1x32xf32> to vector<8x32xf32>
    %216 = arith.addf %214, %215 : vector<8x32xf32>
    %217 = arith.mulf %204, %216 : vector<8x32xf32>
    %218 = arith.addf %213, %217 : vector<8x32xf32>
    %219 = math.tanh %218 : vector<8x32xf32>
    %cst_52 = arith.constant 1.000000e+00 : f32
    %220 = vector.broadcast %cst_52 : f32 to vector<8x32xf32>
    %221 = arith.subf %220, %212 : vector<8x32xf32>
    %222 = arith.mulf %221, %219 : vector<8x32xf32>
    %223 = arith.mulf %212, %188 : vector<8x32xf32>
    %224 = arith.addf %222, %223 : vector<8x32xf32>
    %225 = arith.index_cast %192 : i32 to index
    %c0_53 = arith.constant 0 : index
    %226 = vector.load %arg10[%225, %c0_53] : memref<64x32xf32, #tpu.memory_space<vmem>>, vector<8x32xf32>
    tpu.vector_store %arg10[%225, %c0_53], %224 {strides = array<i32>} : memref<64x32xf32, #tpu.memory_space<vmem>>, vector<8x32xf32>,
    %c6_i32 = arith.constant 6 : i32
    %c8_i32_54 = arith.constant 8 : i32
    %227 = arith.muli %c6_i32, %c8_i32_54 : i32
    %228 = tpu.assume_multiple %227, 8 : i32
    %229 = arith.index_cast %228 : i32 to index
    %c0_55 = arith.constant 0 : index
    %230 = vector.load %arg9[%229, %c0_55] : memref<64x96xf32, #tpu.memory_space<vmem>>, vector<8x96xf32>
    %231 = arith.truncf %224 : vector<8x32xf32> to vector<8x32xbf16>
    %cst_56 = arith.constant dense<0.000000e+00> : vector<8x96xf32>
    %232 = tpu.matmul %231, %8, %cst_56 {dimension_numbers = #tpu.dot_dimension_numbers<[1], [0], [0], [1], [0, 0, 1, 1], [], []>} : vector<8x32xbf16>, vector<32x96xbf16>, vector<8x96xf32> -> vector<8x96xf32>
    %233 = vector.extract_strided_slice %230 {offsets = [0, 0], sizes = [8, 32], strides = [1, 1]} : vector<8x96xf32> to vector<8x32xf32>
    %234 = vector.extract_strided_slice %232 {offsets = [0, 0], sizes = [8, 32], strides = [1, 1]} : vector<8x96xf32> to vector<8x32xf32>
    %235 = arith.addf %233, %234 : vector<8x32xf32>
    %236 = arith.negf %235 : vector<8x32xf32>
    %237 = math.exp %236 : vector<8x32xf32>
    %cst_57 = arith.constant 1.000000e+00 : f32
    %238 = vector.broadcast %cst_57 : f32 to vector<8x32xf32>
    %239 = arith.addf %238, %237 : vector<8x32xf32>
    %240 = arith.divf %238, %239 : vector<8x32xf32>
    %241 = vector.extract_strided_slice %230 {offsets = [0, 32], sizes = [8, 32], strides = [1, 1]} : vector<8x96xf32> to vector<8x32xf32>
    %242 = vector.extract_strided_slice %232 {offsets = [0, 32], sizes = [8, 32], strides = [1, 1]} : vector<8x96xf32> to vector<8x32xf32>
    %243 = arith.addf %241, %242 : vector<8x32xf32>
    %244 = arith.negf %243 : vector<8x32xf32>
    %245 = math.exp %244 : vector<8x32xf32>
    %cst_58 = arith.constant 1.000000e+00 : f32
    %246 = vector.broadcast %cst_58 : f32 to vector<8x32xf32>
    %247 = arith.addf %246, %245 : vector<8x32xf32>
    %248 = arith.divf %246, %247 : vector<8x32xf32>
    %249 = vector.extract_strided_slice %230 {offsets = [0, 64], sizes = [8, 32], strides = [1, 1]} : vector<8x96xf32> to vector<8x32xf32>
    %250 = vector.extract_strided_slice %232 {offsets = [0, 64], sizes = [8, 32], strides = [1, 1]} : vector<8x96xf32> to vector<8x32xf32>
    %251 = vector.broadcast %9 : vector<1x32xf32> to vector<8x32xf32>
    %252 = arith.addf %250, %251 : vector<8x32xf32>
    %253 = arith.mulf %240, %252 : vector<8x32xf32>
    %254 = arith.addf %249, %253 : vector<8x32xf32>
    %255 = math.tanh %254 : vector<8x32xf32>
    %cst_59 = arith.constant 1.000000e+00 : f32
    %256 = vector.broadcast %cst_59 : f32 to vector<8x32xf32>
    %257 = arith.subf %256, %248 : vector<8x32xf32>
    %258 = arith.mulf %257, %255 : vector<8x32xf32>
    %259 = arith.mulf %248, %224 : vector<8x32xf32>
    %260 = arith.addf %258, %259 : vector<8x32xf32>
    %261 = arith.index_cast %228 : i32 to index
    %c0_60 = arith.constant 0 : index
    %262 = vector.load %arg10[%261, %c0_60] : memref<64x32xf32, #tpu.memory_space<vmem>>, vector<8x32xf32>
    tpu.vector_store %arg10[%261, %c0_60], %260 {strides = array<i32>} : memref<64x32xf32, #tpu.memory_space<vmem>>, vector<8x32xf32>,
    %c7_i32 = arith.constant 7 : i32
    %c8_i32_61 = arith.constant 8 : i32
    %263 = arith.muli %c7_i32, %c8_i32_61 : i32
    %264 = tpu.assume_multiple %263, 8 : i32
    %265 = arith.index_cast %264 : i32 to index
    %c0_62 = arith.constant 0 : index
    %266 = vector.load %arg9[%265, %c0_62] : memref<64x96xf32, #tpu.memory_space<vmem>>, vector<8x96xf32>
    %267 = arith.truncf %260 : vector<8x32xf32> to vector<8x32xbf16>
    %cst_63 = arith.constant dense<0.000000e+00> : vector<8x96xf32>
    %268 = tpu.matmul %267, %8, %cst_63 {dimension_numbers = #tpu.dot_dimension_numbers<[1], [0], [0], [1], [0, 0, 1, 1], [], []>} : vector<8x32xbf16>, vector<32x96xbf16>, vector<8x96xf32> -> vector<8x96xf32>
    %269 = vector.extract_strided_slice %266 {offsets = [0, 0], sizes = [8, 32], strides = [1, 1]} : vector<8x96xf32> to vector<8x32xf32>
    %270 = vector.extract_strided_slice %268 {offsets = [0, 0], sizes = [8, 32], strides = [1, 1]} : vector<8x96xf32> to vector<8x32xf32>
    %271 = arith.addf %269, %270 : vector<8x32xf32>
    %272 = arith.negf %271 : vector<8x32xf32>
    %273 = math.exp %272 : vector<8x32xf32>
    %cst_64 = arith.constant 1.000000e+00 : f32
    %274 = vector.broadcast %cst_64 : f32 to vector<8x32xf32>
    %275 = arith.addf %274, %273 : vector<8x32xf32>
    %276 = arith.divf %274, %275 : vector<8x32xf32>
    %277 = vector.extract_strided_slice %266 {offsets = [0, 32], sizes = [8, 32], strides = [1, 1]} : vector<8x96xf32> to vector<8x32xf32>
    %278 = vector.extract_strided_slice %268 {offsets = [0, 32], sizes = [8, 32], strides = [1, 1]} : vector<8x96xf32> to vector<8x32xf32>
    %279 = arith.addf %277, %278 : vector<8x32xf32>
    %280 = arith.negf %279 : vector<8x32xf32>
    %281 = math.exp %280 : vector<8x32xf32>
    %cst_65 = arith.constant 1.000000e+00 : f32
    %282 = vector.broadcast %cst_65 : f32 to vector<8x32xf32>
    %283 = arith.addf %282, %281 : vector<8x32xf32>
    %284 = arith.divf %282, %283 : vector<8x32xf32>
    %285 = vector.extract_strided_slice %266 {offsets = [0, 64], sizes = [8, 32], strides = [1, 1]} : vector<8x96xf32> to vector<8x32xf32>
    %286 = vector.extract_strided_slice %268 {offsets = [0, 64], sizes = [8, 32], strides = [1, 1]} : vector<8x96xf32> to vector<8x32xf32>
    %287 = vector.broadcast %9 : vector<1x32xf32> to vector<8x32xf32>
    %288 = arith.addf %286, %287 : vector<8x32xf32>
    %289 = arith.mulf %276, %288 : vector<8x32xf32>
    %290 = arith.addf %285, %289 : vector<8x32xf32>
    %291 = math.tanh %290 : vector<8x32xf32>
    %cst_66 = arith.constant 1.000000e+00 : f32
    %292 = vector.broadcast %cst_66 : f32 to vector<8x32xf32>
    %293 = arith.subf %292, %284 : vector<8x32xf32>
    %294 = arith.mulf %293, %291 : vector<8x32xf32>
    %295 = arith.mulf %284, %260 : vector<8x32xf32>
    %296 = arith.addf %294, %295 : vector<8x32xf32>
    %297 = arith.index_cast %264 : i32 to index
    %c0_67 = arith.constant 0 : index
    %298 = vector.load %arg10[%297, %c0_67] : memref<64x32xf32, #tpu.memory_space<vmem>>, vector<8x32xf32>
    tpu.vector_store %arg10[%297, %c0_67], %296 {strides = array<i32>} : memref<64x32xf32, #tpu.memory_space<vmem>>, vector<8x32xf32>,
    %c8_i32_68 = arith.constant 8 : i32
    %c0_69 = arith.constant 0 : index
    %c0_70 = arith.constant 0 : index
    %299 = vector.load %arg10[%c0_69, %c0_70] : memref<64x32xf32, #tpu.memory_space<vmem>>, vector<64x32xf32>
    %300 = arith.truncf %299 : vector<64x32xf32> to vector<64x32xbf16>
    %c0_71 = arith.constant 0 : index
    %c0_72 = arith.constant 0 : index
    %301 = vector.load %arg6[%c0_71, %c0_72] : memref<32x128xbf16, #tpu.memory_space<vmem>>, vector<32x128xbf16>
    %cst_73 = arith.constant dense<0.000000e+00> : vector<64x128xf32>
    %302 = tpu.matmul %300, %301, %cst_73 {dimension_numbers = #tpu.dot_dimension_numbers<[1], [0], [0], [1], [0, 0, 1, 1], [], []>} : vector<64x32xbf16>, vector<32x128xbf16>, vector<64x128xf32> -> vector<64x128xf32>
    %c0_74 = arith.constant 0 : index
    %c0_75 = arith.constant 0 : index
    %303 = vector.load %arg7[%c0_74, %c0_75] : memref<1x128xf32, #tpu.memory_space<vmem>>, vector<1x128xf32>
    %304 = vector.broadcast %303 : vector<1x128xf32> to vector<64x128xf32>
    %305 = arith.addf %302, %304 : vector<64x128xf32>
    %cst_76 = arith.constant dense<0xFF800000> : vector<64xf32>
    %306 = vector.multi_reduction <maximumf>, %305, %cst_76 [1] : vector<64x128xf32> to vector<64xf32>
    %307 = vector.shape_cast %306 : vector<64xf32> to vector<64x1xf32>
    %308 = vector.broadcast %307 : vector<64x1xf32> to vector<64x128xf32>
    %309 = arith.subf %305, %308 : vector<64x128xf32>
    %310 = math.exp %309 : vector<64x128xf32>
    %cst_77 = arith.constant dense<0.000000e+00> : vector<64xf32>
    %311 = vector.multi_reduction <add>, %310, %cst_77 [1] : vector<64x128xf32> to vector<64xf32>
    %312 = vector.shape_cast %311 : vector<64xf32> to vector<64x1xf32>
    %313 = math.log %312 : vector<64x1xf32>
    %314 = vector.broadcast %313 : vector<64x1xf32> to vector<64x128xf32>
    %315 = arith.subf %309, %314 : vector<64x128xf32>
    %316 = vector.shape_cast %315 : vector<64x128xf32> to vector<8x8x128xf32>
    %c0_78 = arith.constant 0 : index
    %c0_79 = arith.constant 0 : index
    %c0_80 = arith.constant 0 : index
    %317 = vector.load %arg8[%c0_78, %c0_79, %c0_80] : memref<8x8x128xf32, #tpu.memory_space<vmem>>, vector<8x8x128xf32>
    tpu.vector_store %arg8[%c0_78, %c0_79, %c0_80], %316 {strides = array<i32>} : memref<8x8x128xf32, #tpu.memory_space<vmem>>, vector<8x8x128xf32>,
    return
  }
  func.func @transform_0(%arg0: i32) -> (i32, i32, i32) {
    %c0_i32 = arith.constant 0 : i32
    %c0_i32_0 = arith.constant 0 : i32
    %c0_i32_1 = arith.constant 0 : i32
    return %c0_i32, %arg0, %c0_i32_0 : i32, i32, i32
  }
  func.func @transform_1(%arg0: i32) -> (i32, i32) {
    %c0_i32 = arith.constant 0 : i32
    %c0_i32_0 = arith.constant 0 : i32
    %c0_i32_1 = arith.constant 0 : i32
    return %c0_i32, %c0_i32_0 : i32, i32
  }
  func.func @transform_2(%arg0: i32) -> (i32, i32) {
    %c0_i32 = arith.constant 0 : i32
    %c0_i32_0 = arith.constant 0 : i32
    %c0_i32_1 = arith.constant 0 : i32
    return %c0_i32, %c0_i32_0 : i32, i32
  }
  func.func @transform_3(%arg0: i32) -> (i32, i32) {
    %c0_i32 = arith.constant 0 : i32
    %c0_i32_0 = arith.constant 0 : i32
    %c0_i32_1 = arith.constant 0 : i32
    return %c0_i32, %c0_i32_0 : i32, i32
  }
  func.func @transform_4(%arg0: i32) -> (i32, i32) {
    %c0_i32 = arith.constant 0 : i32
    %c0_i32_0 = arith.constant 0 : i32
    %c0_i32_1 = arith.constant 0 : i32
    return %c0_i32, %c0_i32_0 : i32, i32
  }
  func.func @transform_5(%arg0: i32) -> (i32, i32) {
    %c0_i32 = arith.constant 0 : i32
    %c0_i32_0 = arith.constant 0 : i32
    %c0_i32_1 = arith.constant 0 : i32
    return %c0_i32, %c0_i32_0 : i32, i32
  }
  func.func @transform_6(%arg0: i32) -> (i32, i32) {
    %c0_i32 = arith.constant 0 : i32
    %c0_i32_0 = arith.constant 0 : i32
    %c0_i32_1 = arith.constant 0 : i32
    return %c0_i32, %c0_i32_0 : i32, i32
  }
  func.func @transform_7(%arg0: i32) -> (i32, i32, i32) {
    %c0_i32 = arith.constant 0 : i32
    %c0_i32_0 = arith.constant 0 : i32
    %c0_i32_1 = arith.constant 0 : i32
    return %c0_i32, %arg0, %c0_i32_0 : i32, i32, i32
  }
}

</mosaic_0001>

<llo_original>
// kernel: tpu_custom_call.1
$region0: #{tpu_custom_call.1}
  #allocation0 [shape = 'u32[]', space=smem, size = 0x4, offset = 0x4, fixed_abs, tag = 'smem constant byte address 0x4 - core index']
  #allocation1 [shape = 'u32[144,128]{1,0:T(1,128)}', space=vmem, size = 0x12000, scoped, tag = 'internal scratch']
  #allocation2 [shape = 'f32[64,96]{1,0:T(8,128)}', space=vmem, size = 0x8000, scoped, tag = 'scratch operand']
  #allocation3 [shape = 'f32[64,32]{1,0:T(8,128)}', space=vmem, size = 0x8000, scoped, tag = 'scratch operand']
  %s0 = inlined_call_operand.hbm [shape: bf16[8,8,10], index: 0, kind: input, shape index: {}]
  %s1 = inlined_call_operand.hbm [shape: bf16[10,96], index: 1, kind: input, shape index: {}]
  %s2 = inlined_call_operand.hbm [shape: bf16[32,96], index: 2, kind: input, shape index: {}]
  %s3 = inlined_call_operand.vmem [shape: f32[1,96], index: 3, kind: input, shape index: {}]
  %s4 = inlined_call_operand.vmem [shape: f32[1,32], index: 4, kind: input, shape index: {}]
  %s5 = inlined_call_operand.hbm [shape: bf16[32,128], index: 5, kind: input, shape index: {}]
  %s6 = inlined_call_operand.vmem [shape: f32[1,128], index: 6, kind: input, shape index: {}]
  %s7 = inlined_call_operand.hbm [shape: f32[8,8,128], index: 7, kind: output, shape index: {}]
  %s8 = sld [smem:[#allocation0]]
  $region54: #{tpu_custom_call.1} parent=0
    _
  %s10 = ssub.s32 1, %s8
  %s11 = scalar_select 0, %s10, %s8
  $region1: #{tpu_custom_call.1} parent=0
    #allocation4 [shape = 'u8[16384]{0}', space=vmem, size = 0x4000, scoped, tag = 'input window, operand 0, single buffered']
    #allocation5 [shape = 's32[1]{0}', space=sflag, size = 0x4, scoped, tag = 'scoped memory for tpu_custom_call.1']
    #allocation6 [shape = 's32[1]{0}', space=sflag, size = 0x4, scoped, tag = 'scoped memory for tpu_custom_call.1']
    #allocation7 [shape = 'u8[4096]{0}', space=vmem, size = 0x1000, scoped, tag = 'input window, operand 1, single buffered']
    #allocation8 [shape = 's32[1]{0}', space=sflag, size = 0x4, scoped, tag = 'scoped memory for tpu_custom_call.1']
    #allocation9 [shape = 'u8[8192]{0}', space=vmem, size = 0x2000, scoped, tag = 'input window, operand 2, single buffered']
    #allocation10 [shape = 'u8[8192]{0}', space=vmem, size = 0x2000, scoped, tag = 'input window, operand 5, single buffered']
    #allocation11 [shape = 's32[1]{0}', space=sflag, size = 0x4, scoped, tag = 'scoped memory for tpu_custom_call.1']
    #allocation12 [shape = 'u8[32768]{0}', space=vmem, size = 0x8000, scoped, tag = 'output window, operand 0, single buffered']
    %12 = vsyncpa [#allocation5], 0
    %13 = vsyncpa [#allocation8], 0
    %14 = vsyncpa [#allocation11], 0
    %15 = vsyncpa [#allocation6], 0
    // Predicated region
    $region2: #{tpu_custom_call.1} parent=1 // pred_check
      _
    $region3: #{tpu_custom_call.1} parent=1 // pred_check_branch
      %17 = sbr.rel (0) target = $region5
    $region4: #{tpu_custom_call.1} parent=1 // pred_region
      %s19 = ssub.s32 512, 512
      %20 = vsyncadd [#allocation5], %s19
      %s21 = sshll.u32 [#allocation4], 4
      %s22 = int_to_ptr.vmem [resolvable:$true] %s21
      %27 = dma.hbm_to_vmem [thread:$0]  %s0, 512, %s22, [#allocation5], 64, 64, 4
    $region5: #{tpu_custom_call.1} parent=1 // pred_fallthru
      _
    // Predicated region
    $region6: #{tpu_custom_call.1} parent=1 // pred_check
      _
    $region7: #{tpu_custom_call.1} parent=1 // pred_check_branch
      %29 = sbr.rel (0) target = $region9
    $region8: #{tpu_custom_call.1} parent=1 // pred_region
      %s31 = ssub.s32 128, 128
      %32 = vsyncadd [#allocation8], %s31
      %s33 = sshll.u32 [#allocation7], 4
      %s34 = int_to_ptr.vmem [resolvable:$true] %s33
      %39 = dma.hbm_to_vmem [thread:$0]  %s1, 128, %s34, [#allocation8], 64, 64, 4
    $region9: #{tpu_custom_call.1} parent=1 // pred_fallthru
      _
    // Predicated region
    $region10: #{tpu_custom_call.1} parent=1 // pred_check
      _
    $region11: #{tpu_custom_call.1} parent=1 // pred_check_branch
      %41 = sbr.rel (0) target = $region13
    $region12: #{tpu_custom_call.1} parent=1 // pred_region
      %s43 = ssub.s32 256, 256
      %44 = vsyncadd [#allocation8], %s43
      %s45 = sshll.u32 [#allocation9], 4
      %s46 = int_to_ptr.vmem [resolvable:$true] %s45
      %51 = dma.hbm_to_vmem [thread:$0]  %s2, 256, %s46, [#allocation8], 64, 64, 4
    $region13: #{tpu_custom_call.1} parent=1 // pred_fallthru
      _
    // Predicated region
    $region14: #{tpu_custom_call.1} parent=1 // pred_check
      _
    $region15: #{tpu_custom_call.1} parent=1 // pred_check_branch
      %53 = sbr.rel (0) target = $region17
    $region16: #{tpu_custom_call.1} parent=1 // pred_region
      _
    $region17: #{tpu_custom_call.1} parent=1 // pred_fallthru
      _
    // Predicated region
    $region18: #{tpu_custom_call.1} parent=1 // pred_check
      _
    $region19: #{tpu_custom_call.1} parent=1 // pred_check_branch
      %55 = sbr.rel (0) target = $region21
    $region20: #{tpu_custom_call.1} parent=1 // pred_region
      _
    $region21: #{tpu_custom_call.1} parent=1 // pred_fallthru
      _
    // Predicated region
    $region22: #{tpu_custom_call.1} parent=1 // pred_check
      _
    $region23: #{tpu_custom_call.1} parent=1 // pred_check_branch
      %57 = sbr.rel (0) target = $region25
    $region24: #{tpu_custom_call.1} parent=1 // pred_region
      %s59 = ssub.s32 256, 256
      %60 = vsyncadd [#allocation11], %s59
      %s61 = sshll.u32 [#allocation10], 4
      %s62 = int_to_ptr.vmem [resolvable:$true] %s61
      %67 = dma.hbm_to_vmem [thread:$0]  %s5, 256, %s62, [#allocation11], 64, 64, 4
    $region25: #{tpu_custom_call.1} parent=1 // pred_fallthru
      _
    // Predicated region
    $region26: #{tpu_custom_call.1} parent=1 // pred_check
      _
    $region27: #{tpu_custom_call.1} parent=1 // pred_check_branch
      %69 = sbr.rel (0) target = $region29
    $region28: #{tpu_custom_call.1} parent=1 // pred_region
      _
    $region29: #{tpu_custom_call.1} parent=1 // pred_fallthru
      _
    // Predicated region
    $region30: #{tpu_custom_call.1} parent=1 // pred_check
      _
    $region31: #{tpu_custom_call.1} parent=1 // pred_check_branch
      %71 = sbr.rel (0) target = $region33
    $region32: #{tpu_custom_call.1} parent=1 // pred_region
      %72 = dma.done [#allocation5], 512
    $region33: #{tpu_custom_call.1} parent=1 // pred_fallthru
      _
    // Predicated region
    $region34: #{tpu_custom_call.1} parent=1 // pred_check
      _
    $region35: #{tpu_custom_call.1} parent=1 // pred_check_branch
      %74 = sbr.rel (0) target = $region37
    $region36: #{tpu_custom_call.1} parent=1 // pred_region
      %75 = dma.done [#allocation8], 128
    $region37: #{tpu_custom_call.1} parent=1 // pred_fallthru
      _
    // Predicated region
    $region38: #{tpu_custom_call.1} parent=1 // pred_check
      _
    $region39: #{tpu_custom_call.1} parent=1 // pred_check_branch
      %77 = sbr.rel (0) target = $region41
    $region40: #{tpu_custom_call.1} parent=1 // pred_region
      %78 = dma.done [#allocation8], 256
    $region41: #{tpu_custom_call.1} parent=1 // pred_fallthru
      _
    // Predicated region
    $region42: #{tpu_custom_call.1} parent=1 // pred_check
      _
    $region43: #{tpu_custom_call.1} parent=1 // pred_check_branch
      %80 = sbr.rel (0) target = $region45
    $region44: #{tpu_custom_call.1} parent=1 // pred_region
      %81 = dma.done [#allocation11], 256
    $region45: #{tpu_custom_call.1} parent=1 // pred_fallthru
      _
    %v83 = vld [vmem:[#allocation4] sm:$0xf]
    %v84 = vld [vmem:[#allocation4 + $0x4] sm:$0xf]
    %v85 = vld [vmem:[#allocation4 + $0x8] sm:$0xf]
    %v86 = vld [vmem:[#allocation4 + $0xc] sm:$0xf]
    %v87 = vld [vmem:[#allocation4 + $0x10] sm:$0xf]
    %v88 = vld [vmem:[#allocation4 + $0x14] sm:$0xf]
    %v89 = vld [vmem:[#allocation4 + $0x18] sm:$0xf]
    %v90 = vld [vmem:[#allocation4 + $0x1c] sm:$0xf]
    %v91 = vld [vmem:[#allocation7] sm:$0xf]
    %v92 = vld [vmem:[#allocation7 + $0x4] sm:$0x1]
    %v93 = vld [vmem:[%s3] sm:$0x1]
    %v95 = vlaneseq
    %v96 = vshrl.u32 %v95, 7
    %v97 = vsub.s32 0, %v96
    %v98 = vrot.slane %v93, %v97
    %v108 = vunpack.c.l.b16 %v83
    %v109 = vunpack.c.l.b16 %v84
    %v110 = vunpack.c.l.b16 %v85
    %v111 = vunpack.c.l.b16 %v86
    %v112 = vunpack.c.l.b16 %v87
    %v113 = vunpack.c.l.b16 %v88
    %v114 = vunpack.c.l.b16 %v89
    %v115 = vunpack.c.l.b16 %v90
    %v116 = vpack.c.b16 %v109, %v108
    %v117 = vpack.c.b16 %v111, %v110
    %v118 = vpack.c.b16 %v113, %v112
    %v119 = vpack.c.b16 %v115, %v114
    %v122 = vunpack.c.l.b16 %v91
    %v123 = vunpack.c.l.b16 %v92
    %v124 = vpack.c.b16 %v123, %v122
    %vm125 = vcmask 80896
    %v127 = vsel %vm125, %v116, 0
    %v130 = vsel %vm125, %v117, 0
    %v133 = vsel %vm125, %v118, 0
    %v136 = vsel %vm125, %v119, 0
    %vm138 = vcmask 1044480
    %v140 = vsel %vm138, %v124, 0
    %142 = vmatprep.subr.bf16.mxu0 0
    %143 = vmatpush1.bf16.msra.mxu0 0
    %144 = vmatprep.subr.bf16.mxu0 0
    %145 = vmatpush1.bf16.msra.mxu0 0
    %146 = vmatprep.subr.bf16.mxu0 0
    %147 = vmatpush1.bf16.msra.mxu0 0
    %148 = vmatprep.subr.bf16.mxu0 0
    %149 = vmatpush1.bf16.msra.mxu0 0
    %150 = vmatprep.subr.bf16.mxu0 0
    %151 = vmatpush1.bf16.msra.mxu0 0
    %152 = vmatprep.subr.bf16.mxu0 0
    %153 = vmatpush1.bf16.msra.mxu0 0
    %154 = vmatprep.subr.bf16.mxu0 0
    %155 = vmatpush1.bf16.msra.mxu0 0
    %156 = vmatprep.subr.bf16.mxu0 0
    %157 = vmatpush1.bf16.msra.mxu0 %v140
    %158 = vmatprep.subr.bf16.mxu0 0
    %159 = vmatpush2.bf16.msra.mxu0 0
    %160 = vmatprep.subr.bf16.mxu0 0
    %161 = vmatpush2.bf16.msra.mxu0 0
    %162 = vmatprep.subr.bf16.mxu0 0
    %163 = vmatpush2.bf16.msra.mxu0 0
    %164 = vmatprep.subr.bf16.mxu0 0
    %165 = vmatpush2.bf16.msra.mxu0 0
    %166 = vmatprep.subr.bf16.mxu0 0
    %167 = vmatpush2.bf16.msra.mxu0 0
    %168 = vmatprep.subr.bf16.mxu0 0
    %169 = vmatpush2.bf16.msra.mxu0 0
    %170 = vmatprep.subr.bf16.mxu0 0
    %171 = vmatpush2.bf16.msra.mxu0 0
    %172 = vmatprep.subr.bf16.mxu0 0
    %173 = vmatpush2.bf16.msra.mxu0 0
    %174 = vmatprep.mubr.bf16.mxu0 0
    %175 = vmatmul.mubr.bf16.gmra.mxu0 %v127
    %v176 = vpop.f32.mrf.mxu0
    %v177 = vadd.f32 %v98, %v176
    %v178 = vpop.f32.mrf.mxu0
    %v179 = vpop.f32.mrf.mxu0
    %v180 = vadd.f32 %v98, %v179
    %v181 = vpop.f32.mrf.mxu0
    %182 = vmatprep.mubr.bf16.mxu0 0
    %183 = vmatmul.mubr.bf16.gmra.mxu0 %v130
    %v184 = vpop.f32.mrf.mxu0
    %v185 = vadd.f32 %v98, %v184
    %v186 = vpop.f32.mrf.mxu0
    %v187 = vpop.f32.mrf.mxu0
    %v188 = vadd.f32 %v98, %v187
    %v189 = vpop.f32.mrf.mxu0
    %190 = vmatprep.mubr.bf16.mxu0 0
    %191 = vmatmul.mubr.bf16.gmra.mxu0 %v133
    %v192 = vpop.f32.mrf.mxu0
    %v193 = vadd.f32 %v98, %v192
    %v194 = vpop.f32.mrf.mxu0
    %v195 = vpop.f32.mrf.mxu0
    %v196 = vadd.f32 %v98, %v195
    %v197 = vpop.f32.mrf.mxu0
    %198 = vmatprep.mubr.bf16.mxu0 0
    %199 = vmatmul.mubr.bf16.gmra.mxu0 %v136
    %v200 = vpop.f32.mrf.mxu0
    %v201 = vadd.f32 %v98, %v200
    %v202 = vpop.f32.mrf.mxu0
    %v203 = vpop.f32.mrf.mxu0
    %v204 = vadd.f32 %v98, %v203
    %v205 = vpop.f32.mrf.mxu0
    %206 = vdwg.mxu0
    %vm207 = vcmask 785408
    %208 = vst.msk [vmem:[#allocation2] sm:$0xff] %vm207, %v177
    %209 = vst.msk [vmem:[#allocation2 + $0x8] sm:$0xff] %vm207, %v180
    %210 = vst.msk [vmem:[#allocation2 + $0x10] sm:$0xff] %vm207, %v185
    %211 = vst.msk [vmem:[#allocation2 + $0x18] sm:$0xff] %vm207, %v188
    %212 = vst.msk [vmem:[#allocation2 + $0x20] sm:$0xff] %vm207, %v193
    %213 = vst.msk [vmem:[#allocation2 + $0x28] sm:$0xff] %vm207, %v196
    %214 = vst.msk [vmem:[#allocation2 + $0x30] sm:$0xff] %vm207, %v201
    %215 = vst.msk [vmem:[#allocation2 + $0x38] sm:$0xff] %vm207, %v204
    %v216 = vld [vmem:[#allocation9] sm:$0xf]
    %v217 = vld [vmem:[#allocation9 + $0x4] sm:$0xf]
    %v218 = vld [vmem:[#allocation9 + $0x8] sm:$0xf]
    %v219 = vld [vmem:[#allocation9 + $0xc] sm:$0xf]
    %v220 = vld [vmem:[%s4] sm:$0x1]
    %v221 = vld [vmem:[#allocation2] sm:$0xff]
    %v226 = vunpack.c.l.b16 %v216
    %v227 = vunpack.c.l.b16 %v217
    %v228 = vunpack.c.l.b16 %v218
    %v229 = vunpack.c.l.b16 %v219
    %v230 = vpack.c.b16 %v227, %v226
    %v231 = vpack.c.b16 %v229, %v228
    %vm234 = vcmask 261120
    %v236 = vsel %vm234, 0, 0
    %238 = vmatprep.subr.bf16.mxu0 0
    %239 = vmatpush1.bf16.msra.mxu0 0
    %240 = vmatprep.subr.bf16.mxu0 0
    %241 = vmatpush1.bf16.msra.mxu0 0
    %242 = vmatprep.subr.bf16.mxu0 0
    %243 = vmatpush1.bf16.msra.mxu0 0
    %244 = vmatprep.subr.bf16.mxu0 0
    %245 = vmatpush1.bf16.msra.mxu0 0
    %246 = vmatprep.subr.bf16.mxu0 0
    %247 = vmatpush1.bf16.msra.mxu0 0
    %248 = vmatprep.subr.bf16.mxu0 0
    %249 = vmatpush1.bf16.msra.mxu0 0
    %250 = vmatprep.subr.bf16.mxu0 0
    %251 = vmatpush1.bf16.msra.mxu0 %v231
    %252 = vmatprep.subr.bf16.mxu0 0
    %253 = vmatpush1.bf16.msra.mxu0 %v230
    %254 = vmatprep.subr.bf16.mxu0 0
    %255 = vmatpush2.bf16.msra.mxu0 0
    %256 = vmatprep.subr.bf16.mxu0 0
    %257 = vmatpush2.bf16.msra.mxu0 0
    %258 = vmatprep.subr.bf16.mxu0 0
    %259 = vmatpush2.bf16.msra.mxu0 0
    %260 = vmatprep.subr.bf16.mxu0 0
    %261 = vmatpush2.bf16.msra.mxu0 0
    %262 = vmatprep.subr.bf16.mxu0 0
    %263 = vmatpush2.bf16.msra.mxu0 0
    %264 = vmatprep.subr.bf16.mxu0 0
    %265 = vmatpush2.bf16.msra.mxu0 0
    %266 = vmatprep.subr.bf16.mxu0 0
    %267 = vmatpush2.bf16.msra.mxu0 0
    %268 = vmatprep.subr.bf16.mxu0 0
    %269 = vmatpush2.bf16.msra.mxu0 0
    %270 = vmatprep.mubr.bf16.mxu0 0
    %271 = vmatmul.mubr.bf16.gmra.mxu0 %v236
    %v272 = vpop.f32.mrf.mxu0
    %v273 = vadd.f32 0.0, %v272
    %v274 = vpop.f32.mrf.mxu0
    %v275 = vpop.f32.mrf.mxu0
    %v276 = vpop.f32.mrf.mxu0
    %277 = vdwg.mxu0
    %v278 = vadd.f32 %v221, %v273
    %v279 = vxor.u32 %v278, 2147483648
    %v280 = vmul.f32 %v279, 1.442695
    %v281 = vpow.pop %v280
    %v282 = vadd.f32 %v281, 1.0
    %v283 = vrcp.pop %v282
    %v284 = vmul.f32 1.0, %v283
    %v286 = vlaneseq
    %v287 = vshrl.u32 %v286, 7
    %v288 = vsub.s32 0, %v287
    %v289 = vrot.slane %v220, %v288
    %290 = vrot.lane.b32.xlu0 %v289, 64
    %v291 = vpop.permute.xlu0 %290
    %v293 = vadd.f32 %v273, %v291
    %295 = vrot.lane.b32.xlu0 %v293, 64
    %v296 = vpop.permute.xlu0 %295
    %v298 = vmul.f32 %v284, %v296
    %300 = vrot.lane.b32.xlu0 %v298, 64
    %v301 = vpop.permute.xlu0 %300
    %v303 = vadd.f32 %v221, %v301
    %v304 = vtanh.pop %v303
    %v305 = vsub.f32 1.0, %v284
    %307 = vrot.lane.b32.xlu0 %v304, 96
    %v308 = vpop.permute.xlu0 %307
    %v310 = vmul.f32 %v305, %v308
    %v311 = vmul.f32 %v284, 0.0
    %v312 = vadd.f32 %v310, %v311
    %314 = vrot.lane.b32.xlu0 %v312, 96
    %v315 = vpop.permute.xlu0 %314
    %317 = vst.msk [vmem:[#allocation3] sm:$0xff] %vm234, %v315
    %s318 = scalar_lea.vmem [#allocation2], 8
    %v319 = vld [vmem:[%s318] sm:$0xff]
    %v320 = vpack.c.bf16 %v312, %v312
    %322 = vrot.lane.b32.xlu0 %v320, 96
    %v323 = vpop.permute.xlu0 %322
    %v325 = vsel %vm234, %v323, 0
    %327 = vmatprep.subr.bf16.mxu0 0
    %328 = vmatpush1.bf16.msra.mxu0 0
    %329 = vmatprep.subr.bf16.mxu0 0
    %330 = vmatpush1.bf16.msra.mxu0 0
    %331 = vmatprep.subr.bf16.mxu0 0
    %332 = vmatpush1.bf16.msra.mxu0 0
    %333 = vmatprep.subr.bf16.mxu0 0
    %334 = vmatpush1.bf16.msra.mxu0 0
    %335 = vmatprep.subr.bf16.mxu0 0
    %336 = vmatpush1.bf16.msra.mxu0 0
    %337 = vmatprep.subr.bf16.mxu0 0
    %338 = vmatpush1.bf16.msra.mxu0 0
    %339 = vmatprep.subr.bf16.mxu0 0
    %340 = vmatpush1.bf16.msra.mxu0 %v231
    %341 = vmatprep.subr.bf16.mxu0 0
    %342 = vmatpush1.bf16.msra.mxu0 %v230
    %343 = vmatprep.subr.bf16.mxu0 0
    %344 = vmatpush2.bf16.msra.mxu0 0
    %345 = vmatprep.subr.bf16.mxu0 0
    %346 = vmatpush2.bf16.msra.mxu0 0
    %347 = vmatprep.subr.bf16.mxu0 0
    %348 = vmatpush2.bf16.msra.mxu0 0
    %349 = vmatprep.subr.bf16.mxu0 0
    %350 = vmatpush2.bf16.msra.mxu0 0
    %351 = vmatprep.subr.bf16.mxu0 0
    %352 = vmatpush2.bf16.msra.mxu0 0
    %353 = vmatprep.subr.bf16.mxu0 0
    %354 = vmatpush2.bf16.msra.mxu0 0
    %355 = vmatprep.subr.bf16.mxu0 0
    %356 = vmatpush2.bf16.msra.mxu0 0
    %357 = vmatprep.subr.bf16.mxu0 0
    %358 = vmatpush2.bf16.msra.mxu0 0
    %359 = vmatprep.mubr.bf16.mxu0 0
    %360 = vmatmul.mubr.bf16.gmra.mxu0 %v325
    %v361 = vpop.f32.mrf.mxu0
    %v362 = vadd.f32 0.0, %v361
    %v363 = vpop.f32.mrf.mxu0
    %v364 = vpop.f32.mrf.mxu0
    %v365 = vpop.f32.mrf.mxu0
    %366 = vdwg.mxu0
    %v367 = vadd.f32 %v319, %v362
    %v368 = vxor.u32 %v367, 2147483648
    %v369 = vmul.f32 %v368, 1.442695
    %v370 = vpow.pop %v369
    %v371 = vadd.f32 %v370, 1.0
    %v372 = vrcp.pop %v371
    %v373 = vmul.f32 1.0, %v372
    %v374 = vadd.f32 %v362, %v291
    %376 = vrot.lane.b32.xlu0 %v374, 64
    %v377 = vpop.permute.xlu0 %376
    %v379 = vmul.f32 %v373, %v377
    %381 = vrot.lane.b32.xlu0 %v379, 64
    %v382 = vpop.permute.xlu0 %381
    %v384 = vadd.f32 %v319, %v382
    %v385 = vtanh.pop %v384
    %v386 = vsub.f32 1.0, %v373
    %388 = vrot.lane.b32.xlu0 %v385, 96
    %v389 = vpop.permute.xlu0 %388
    %v391 = vmul.f32 %v386, %v389
    %v392 = vmul.f32 %v373, %v312
    %v393 = vadd.f32 %v391, %v392
    %395 = vrot.lane.b32.xlu0 %v393, 96
    %v396 = vpop.permute.xlu0 %395
    %s398 = scalar_lea.vmem [#allocation3], 8
    %399 = vst.msk [vmem:[%s398] sm:$0xff] %vm234, %v396
    %s400 = scalar_lea.vmem [#allocation2], 16
    %v401 = vld [vmem:[%s400] sm:$0xff]
    %v402 = vpack.c.bf16 %v393, %v393
    %404 = vrot.lane.b32.xlu0 %v402, 96
    %v405 = vpop.permute.xlu0 %404
    %v407 = vsel %vm234, %v405, 0
    %409 = vmatprep.subr.bf16.mxu0 0
    %410 = vmatpush1.bf16.msra.mxu0 0
    %411 = vmatprep.subr.bf16.mxu0 0
    %412 = vmatpush1.bf16.msra.mxu0 0
    %413 = vmatprep.subr.bf16.mxu0 0
    %414 = vmatpush1.bf16.msra.mxu0 0
    %415 = vmatprep.subr.bf16.mxu0 0
    %416 = vmatpush1.bf16.msra.mxu0 0
    %417 = vmatprep.subr.bf16.mxu0 0
    %418 = vmatpush1.bf16.msra.mxu0 0
    %419 = vmatprep.subr.bf16.mxu0 0
    %420 = vmatpush1.bf16.msra.mxu0 0
    %421 = vmatprep.subr.bf16.mxu0 0
    %422 = vmatpush1.bf16.msra.mxu0 %v231
    %423 = vmatprep.subr.bf16.mxu0 0
    %424 = vmatpush1.bf16.msra.mxu0 %v230
    %425 = vmatprep.subr.bf16.mxu0 0
    %426 = vmatpush2.bf16.msra.mxu0 0
    %427 = vmatprep.subr.bf16.mxu0 0
    %428 = vmatpush2.bf16.msra.mxu0 0
    %429 = vmatprep.subr.bf16.mxu0 0
    %430 = vmatpush2.bf16.msra.mxu0 0
    %431 = vmatprep.subr.bf16.mxu0 0
    %432 = vmatpush2.bf16.msra.mxu0 0
    %433 = vmatprep.subr.bf16.mxu0 0
    %434 = vmatpush2.bf16.msra.mxu0 0
    %435 = vmatprep.subr.bf16.mxu0 0
    %436 = vmatpush2.bf16.msra.mxu0 0
    %437 = vmatprep.subr.bf16.mxu0 0
    %438 = vmatpush2.bf16.msra.mxu0 0
    %439 = vmatprep.subr.bf16.mxu0 0
    %440 = vmatpush2.bf16.msra.mxu0 0
    %441 = vmatprep.mubr.bf16.mxu0 0
    %442 = vmatmul.mubr.bf16.gmra.mxu0 %v407
    %v443 = vpop.f32.mrf.mxu0
    %v444 = vadd.f32 0.0, %v443
    %v445 = vpop.f32.mrf.mxu0
    %v446 = vpop.f32.mrf.mxu0
    %v447 = vpop.f32.mrf.mxu0
    %448 = vdwg.mxu0
    %v449 = vadd.f32 %v401, %v444
    %v450 = vxor.u32 %v449, 2147483648
    %v451 = vmul.f32 %v450, 1.442695
    %v452 = vpow.pop %v451
    %v453 = vadd.f32 %v452, 1.0
    %v454 = vrcp.pop %v453
    %v455 = vmul.f32 1.0, %v454
    %v456 = vadd.f32 %v444, %v291
    %458 = vrot.lane.b32.xlu0 %v456, 64
    %v459 = vpop.permute.xlu0 %458
    %v461 = vmul.f32 %v455, %v459
    %463 = vrot.lane.b32.xlu0 %v461, 64
    %v464 = vpop.permute.xlu0 %463
    %v466 = vadd.f32 %v401, %v464
    %v467 = vtanh.pop %v466
    %v468 = vsub.f32 1.0, %v455
    %470 = vrot.lane.b32.xlu0 %v467, 96
    %v471 = vpop.permute.xlu0 %470
    %v473 = vmul.f32 %v468, %v471
    %v474 = vmul.f32 %v455, %v393
    %v475 = vadd.f32 %v473, %v474
    %477 = vrot.lane.b32.xlu0 %v475, 96
    %v478 = vpop.permute.xlu0 %477
    %s480 = scalar_lea.vmem [#allocation3], 16
    %481 = vst.msk [vmem:[%s480] sm:$0xff] %vm234, %v478
    %s482 = scalar_lea.vmem [#allocation2], 24
    %v483 = vld [vmem:[%s482] sm:$0xff]
    %v484 = vpack.c.bf16 %v475, %v475
    %486 = vrot.lane.b32.xlu0 %v484, 96
    %v487 = vpop.permute.xlu0 %486
    %v489 = vsel %vm234, %v487, 0
    %491 = vmatprep.subr.bf16.mxu0 0
    %492 = vmatpush1.bf16.msra.mxu0 0
    %493 = vmatprep.subr.bf16.mxu0 0
    %494 = vmatpush1.bf16.msra.mxu0 0
    %495 = vmatprep.subr.bf16.mxu0 0
    %496 = vmatpush1.bf16.msra.mxu0 0
    %497 = vmatprep.subr.bf16.mxu0 0
    %498 = vmatpush1.bf16.msra.mxu0 0
    %499 = vmatprep.subr.bf16.mxu0 0
    %500 = vmatpush1.bf16.msra.mxu0 0
    %501 = vmatprep.subr.bf16.mxu0 0
    %502 = vmatpush1.bf16.msra.mxu0 0
    %503 = vmatprep.subr.bf16.mxu0 0
    %504 = vmatpush1.bf16.msra.mxu0 %v231
    %505 = vmatprep.subr.bf16.mxu0 0
    %506 = vmatpush1.bf16.msra.mxu0 %v230
    %507 = vmatprep.subr.bf16.mxu0 0
    %508 = vmatpush2.bf16.msra.mxu0 0
    %509 = vmatprep.subr.bf16.mxu0 0
    %510 = vmatpush2.bf16.msra.mxu0 0
    %511 = vmatprep.subr.bf16.mxu0 0
    %512 = vmatpush2.bf16.msra.mxu0 0
    %513 = vmatprep.subr.bf16.mxu0 0
    %514 = vmatpush2.bf16.msra.mxu0 0
    %515 = vmatprep.subr.bf16.mxu0 0
    %516 = vmatpush2.bf16.msra.mxu0 0
    %517 = vmatprep.subr.bf16.mxu0 0
    %518 = vmatpush2.bf16.msra.mxu0 0
    %519 = vmatprep.subr.bf16.mxu0 0
    %520 = vmatpush2.bf16.msra.mxu0 0
    %521 = vmatprep.subr.bf16.mxu0 0
    %522 = vmatpush2.bf16.msra.mxu0 0
    %523 = vmatprep.mubr.bf16.mxu0 0
    %524 = vmatmul.mubr.bf16.gmra.mxu0 %v489
    %v525 = vpop.f32.mrf.mxu0
    %v526 = vadd.f32 0.0, %v525
    %v527 = vpop.f32.mrf.mxu0
    %v528 = vpop.f32.mrf.mxu0
    %v529 = vpop.f32.mrf.mxu0
    %530 = vdwg.mxu0
    %v531 = vadd.f32 %v483, %v526
    %v532 = vxor.u32 %v531, 2147483648
    %v533 = vmul.f32 %v532, 1.442695
    %v534 = vpow.pop %v533
    %v535 = vadd.f32 %v534, 1.0
    %v536 = vrcp.pop %v535
    %v537 = vmul.f32 1.0, %v536
    %v538 = vadd.f32 %v526, %v291
    %540 = vrot.lane.b32.xlu0 %v538, 64
    %v541 = vpop.permute.xlu0 %540
    %v543 = vmul.f32 %v537, %v541
    %545 = vrot.lane.b32.xlu0 %v543, 64
    %v546 = vpop.permute.xlu0 %545
    %v548 = vadd.f32 %v483, %v546
    %v549 = vtanh.pop %v548
    %v550 = vsub.f32 1.0, %v537
    %552 = vrot.lane.b32.xlu0 %v549, 96
    %v553 = vpop.permute.xlu0 %552
    %v555 = vmul.f32 %v550, %v553
    %v556 = vmul.f32 %v537, %v475
    %v557 = vadd.f32 %v555, %v556
    %559 = vrot.lane.b32.xlu0 %v557, 96
    %v560 = vpop.permute.xlu0 %559
    %s562 = scalar_lea.vmem [#allocation3], 24
    %563 = vst.msk [vmem:[%s562] sm:$0xff] %vm234, %v560
    %s564 = scalar_lea.vmem [#allocation2], 32
    %v565 = vld [vmem:[%s564] sm:$0xff]
    %v566 = vpack.c.bf16 %v557, %v557
    %568 = vrot.lane.b32.xlu0 %v566, 96
    %v569 = vpop.permute.xlu0 %568
    %v571 = vsel %vm234, %v569, 0
    %573 = vmatprep.subr.bf16.mxu0 0
    %574 = vmatpush1.bf16.msra.mxu0 0
    %575 = vmatprep.subr.bf16.mxu0 0
    %576 = vmatpush1.bf16.msra.mxu0 0
    %577 = vmatprep.subr.bf16.mxu0 0
    %578 = vmatpush1.bf16.msra.mxu0 0
    %579 = vmatprep.subr.bf16.mxu0 0
    %580 = vmatpush1.bf16.msra.mxu0 0
    %581 = vmatprep.subr.bf16.mxu0 0
    %582 = vmatpush1.bf16.msra.mxu0 0
    %583 = vmatprep.subr.bf16.mxu0 0
    %584 = vmatpush1.bf16.msra.mxu0 0
    %585 = vmatprep.subr.bf16.mxu0 0
    %586 = vmatpush1.bf16.msra.mxu0 %v231
    %587 = vmatprep.subr.bf16.mxu0 0
    %588 = vmatpush1.bf16.msra.mxu0 %v230
    %589 = vmatprep.subr.bf16.mxu0 0
    %590 = vmatpush2.bf16.msra.mxu0 0
    %591 = vmatprep.subr.bf16.mxu0 0
    %592 = vmatpush2.bf16.msra.mxu0 0
    %593 = vmatprep.subr.bf16.mxu0 0
    %594 = vmatpush2.bf16.msra.mxu0 0
    %595 = vmatprep.subr.bf16.mxu0 0
    %596 = vmatpush2.bf16.msra.mxu0 0
    %597 = vmatprep.subr.bf16.mxu0 0
    %598 = vmatpush2.bf16.msra.mxu0 0
    %599 = vmatprep.subr.bf16.mxu0 0
    %600 = vmatpush2.bf16.msra.mxu0 0
    %601 = vmatprep.subr.bf16.mxu0 0
    %602 = vmatpush2.bf16.msra.mxu0 0
    %603 = vmatprep.subr.bf16.mxu0 0
    %604 = vmatpush2.bf16.msra.mxu0 0
    %605 = vmatprep.mubr.bf16.mxu0 0
    %606 = vmatmul.mubr.bf16.gmra.mxu0 %v571
    %v607 = vpop.f32.mrf.mxu0
    %v608 = vadd.f32 0.0, %v607
    %v609 = vpop.f32.mrf.mxu0
    %v610 = vpop.f32.mrf.mxu0
    %v611 = vpop.f32.mrf.mxu0
    %612 = vdwg.mxu0
    %v613 = vadd.f32 %v565, %v608
    %v614 = vxor.u32 %v613, 2147483648
    %v615 = vmul.f32 %v614, 1.442695
    %v616 = vpow.pop %v615
    %v617 = vadd.f32 %v616, 1.0
    %v618 = vrcp.pop %v617
    %v619 = vmul.f32 1.0, %v618
    %v620 = vadd.f32 %v608, %v291
    %622 = vrot.lane.b32.xlu0 %v620, 64
    %v623 = vpop.permute.xlu0 %622
    %v625 = vmul.f32 %v619, %v623
    %627 = vrot.lane.b32.xlu0 %v625, 64
    %v628 = vpop.permute.xlu0 %627
    %v630 = vadd.f32 %v565, %v628
    %v631 = vtanh.pop %v630
    %v632 = vsub.f32 1.0, %v619
    %634 = vrot.lane.b32.xlu0 %v631, 96
    %v635 = vpop.permute.xlu0 %634
    %v637 = vmul.f32 %v632, %v635
    %v638 = vmul.f32 %v619, %v557
    %v639 = vadd.f32 %v637, %v638
    %641 = vrot.lane.b32.xlu0 %v639, 96
    %v642 = vpop.permute.xlu0 %641
    %s644 = scalar_lea.vmem [#allocation3], 32
    %645 = vst.msk [vmem:[%s644] sm:$0xff] %vm234, %v642
    %s646 = scalar_lea.vmem [#allocation2], 40
    %v647 = vld [vmem:[%s646] sm:$0xff]
    %v648 = vpack.c.bf16 %v639, %v639
    %650 = vrot.lane.b32.xlu0 %v648, 96
    %v651 = vpop.permute.xlu0 %650
    %v653 = vsel %vm234, %v651, 0
    %655 = vmatprep.subr.bf16.mxu0 0
    %656 = vmatpush1.bf16.msra.mxu0 0
    %657 = vmatprep.subr.bf16.mxu0 0
    %658 = vmatpush1.bf16.msra.mxu0 0
    %659 = vmatprep.subr.bf16.mxu0 0
    %660 = vmatpush1.bf16.msra.mxu0 0
    %661 = vmatprep.subr.bf16.mxu0 0
    %662 = vmatpush1.bf16.msra.mxu0 0
    %663 = vmatprep.subr.bf16.mxu0 0
    %664 = vmatpush1.bf16.msra.mxu0 0
    %665 = vmatprep.subr.bf16.mxu0 0
    %666 = vmatpush1.bf16.msra.mxu0 0
    %667 = vmatprep.subr.bf16.mxu0 0
    %668 = vmatpush1.bf16.msra.mxu0 %v231
    %669 = vmatprep.subr.bf16.mxu0 0
    %670 = vmatpush1.bf16.msra.mxu0 %v230
    %671 = vmatprep.subr.bf16.mxu0 0
    %672 = vmatpush2.bf16.msra.mxu0 0
    %673 = vmatprep.subr.bf16.mxu0 0
    %674 = vmatpush2.bf16.msra.mxu0 0
    %675 = vmatprep.subr.bf16.mxu0 0
    %676 = vmatpush2.bf16.msra.mxu0 0
    %677 = vmatprep.subr.bf16.mxu0 0
    %678 = vmatpush2.bf16.msra.mxu0 0
    %679 = vmatprep.subr.bf16.mxu0 0
    %680 = vmatpush2.bf16.msra.mxu0 0
    %681 = vmatprep.subr.bf16.mxu0 0
    %682 = vmatpush2.bf16.msra.mxu0 0
    %683 = vmatprep.subr.bf16.mxu0 0
    %684 = vmatpush2.bf16.msra.mxu0 0
    %685 = vmatprep.subr.bf16.mxu0 0
    %686 = vmatpush2.bf16.msra.mxu0 0
    %687 = vmatprep.mubr.bf16.mxu0 0
    %688 = vmatmul.mubr.bf16.gmra.mxu0 %v653
    %v689 = vpop.f32.mrf.mxu0
    %v690 = vadd.f32 0.0, %v689
    %v691 = vpop.f32.mrf.mxu0
    %v692 = vpop.f32.mrf.mxu0
    %v693 = vpop.f32.mrf.mxu0
    %694 = vdwg.mxu0
    %v695 = vadd.f32 %v647, %v690
    %v696 = vxor.u32 %v695, 2147483648
    %v697 = vmul.f32 %v696, 1.442695
    %v698 = vpow.pop %v697
    %v699 = vadd.f32 %v698, 1.0
    %v700 = vrcp.pop %v699
    %v701 = vmul.f32 1.0, %v700
    %v702 = vadd.f32 %v690, %v291
    %704 = vrot.lane.b32.xlu0 %v702, 64
    %v705 = vpop.permute.xlu0 %704
    %v707 = vmul.f32 %v701, %v705
    %709 = vrot.lane.b32.xlu0 %v707, 64
    %v710 = vpop.permute.xlu0 %709
    %v712 = vadd.f32 %v647, %v710
    %v713 = vtanh.pop %v712
    %v714 = vsub.f32 1.0, %v701
    %716 = vrot.lane.b32.xlu0 %v713, 96
    %v717 = vpop.permute.xlu0 %716
    %v719 = vmul.f32 %v714, %v717
    %v720 = vmul.f32 %v701, %v639
    %v721 = vadd.f32 %v719, %v720
    %723 = vrot.lane.b32.xlu0 %v721, 96
    %v724 = vpop.permute.xlu0 %723
    %s726 = scalar_lea.vmem [#allocation3], 40
    %727 = vst.msk [vmem:[%s726] sm:$0xff] %vm234, %v724
    %s728 = scalar_lea.vmem [#allocation2], 48
    %v729 = vld [vmem:[%s728] sm:$0xff]
    %v730 = vpack.c.bf16 %v721, %v721
    %732 = vrot.lane.b32.xlu0 %v730, 96
    %v733 = vpop.permute.xlu0 %732
    %v735 = vsel %vm234, %v733, 0
    %737 = vmatprep.subr.bf16.mxu0 0
    %738 = vmatpush1.bf16.msra.mxu0 0
    %739 = vmatprep.subr.bf16.mxu0 0
    %740 = vmatpush1.bf16.msra.mxu0 0
    %741 = vmatprep.subr.bf16.mxu0 0
    %742 = vmatpush1.bf16.msra.mxu0 0
    %743 = vmatprep.subr.bf16.mxu0 0
    %744 = vmatpush1.bf16.msra.mxu0 0
    %745 = vmatprep.subr.bf16.mxu0 0
    %746 = vmatpush1.bf16.msra.mxu0 0
    %747 = vmatprep.subr.bf16.mxu0 0
    %748 = vmatpush1.bf16.msra.mxu0 0
    %749 = vmatprep.subr.bf16.mxu0 0
    %750 = vmatpush1.bf16.msra.mxu0 %v231
    %751 = vmatprep.subr.bf16.mxu0 0
    %752 = vmatpush1.bf16.msra.mxu0 %v230
    %753 = vmatprep.subr.bf16.mxu0 0
    %754 = vmatpush2.bf16.msra.mxu0 0
    %755 = vmatprep.subr.bf16.mxu0 0
    %756 = vmatpush2.bf16.msra.mxu0 0
    %757 = vmatprep.subr.bf16.mxu0 0
    %758 = vmatpush2.bf16.msra.mxu0 0
    %759 = vmatprep.subr.bf16.mxu0 0
    %760 = vmatpush2.bf16.msra.mxu0 0
    %761 = vmatprep.subr.bf16.mxu0 0
    %762 = vmatpush2.bf16.msra.mxu0 0
    %763 = vmatprep.subr.bf16.mxu0 0
    %764 = vmatpush2.bf16.msra.mxu0 0
    %765 = vmatprep.subr.bf16.mxu0 0
    %766 = vmatpush2.bf16.msra.mxu0 0
    %767 = vmatprep.subr.bf16.mxu0 0
    %768 = vmatpush2.bf16.msra.mxu0 0
    %769 = vmatprep.mubr.bf16.mxu0 0
    %770 = vmatmul.mubr.bf16.gmra.mxu0 %v735
    %v771 = vpop.f32.mrf.mxu0
    %v772 = vadd.f32 0.0, %v771
    %v773 = vpop.f32.mrf.mxu0
    %v774 = vpop.f32.mrf.mxu0
    %v775 = vpop.f32.mrf.mxu0
    %776 = vdwg.mxu0
    %v777 = vadd.f32 %v729, %v772
    %v778 = vxor.u32 %v777, 2147483648
    %v779 = vmul.f32 %v778, 1.442695
    %v780 = vpow.pop %v779
    %v781 = vadd.f32 %v780, 1.0
    %v782 = vrcp.pop %v781
    %v783 = vmul.f32 1.0, %v782
    %v784 = vadd.f32 %v772, %v291
    %786 = vrot.lane.b32.xlu0 %v784, 64
    %v787 = vpop.permute.xlu0 %786
    %v789 = vmul.f32 %v783, %v787
    %791 = vrot.lane.b32.xlu0 %v789, 64
    %v792 = vpop.permute.xlu0 %791
    %v794 = vadd.f32 %v729, %v792
    %v795 = vtanh.pop %v794
    %v796 = vsub.f32 1.0, %v783
    %798 = vrot.lane.b32.xlu0 %v795, 96
    %v799 = vpop.permute.xlu0 %798
    %v801 = vmul.f32 %v796, %v799
    %v802 = vmul.f32 %v783, %v721
    %v803 = vadd.f32 %v801, %v802
    %805 = vrot.lane.b32.xlu0 %v803, 96
    %v806 = vpop.permute.xlu0 %805
    %s808 = scalar_lea.vmem [#allocation3], 48
    %809 = vst.msk [vmem:[%s808] sm:$0xff] %vm234, %v806
    %s810 = scalar_lea.vmem [#allocation2], 56
    %v811 = vld [vmem:[%s810] sm:$0xff]
    %v812 = vpack.c.bf16 %v803, %v803
    %814 = vrot.lane.b32.xlu0 %v812, 96
    %v815 = vpop.permute.xlu0 %814
    %v817 = vsel %vm234, %v815, 0
    %819 = vmatprep.subr.bf16.mxu0 0
    %820 = vmatpush1.bf16.msra.mxu0 0
    %821 = vmatprep.subr.bf16.mxu0 0
    %822 = vmatpush1.bf16.msra.mxu0 0
    %823 = vmatprep.subr.bf16.mxu0 0
    %824 = vmatpush1.bf16.msra.mxu0 0
    %825 = vmatprep.subr.bf16.mxu0 0
    %826 = vmatpush1.bf16.msra.mxu0 0
    %827 = vmatprep.subr.bf16.mxu0 0
    %828 = vmatpush1.bf16.msra.mxu0 0
    %829 = vmatprep.subr.bf16.mxu0 0
    %830 = vmatpush1.bf16.msra.mxu0 0
    %831 = vmatprep.subr.bf16.mxu0 0
    %832 = vmatpush1.bf16.msra.mxu0 %v231
    %833 = vmatprep.subr.bf16.mxu0 0
    %834 = vmatpush1.bf16.msra.mxu0 %v230
    %835 = vmatprep.subr.bf16.mxu0 0
    %836 = vmatpush2.bf16.msra.mxu0 0
    %837 = vmatprep.subr.bf16.mxu0 0
    %838 = vmatpush2.bf16.msra.mxu0 0
    %839 = vmatprep.subr.bf16.mxu0 0
    %840 = vmatpush2.bf16.msra.mxu0 0
    %841 = vmatprep.subr.bf16.mxu0 0
    %842 = vmatpush2.bf16.msra.mxu0 0
    %843 = vmatprep.subr.bf16.mxu0 0
    %844 = vmatpush2.bf16.msra.mxu0 0
    %845 = vmatprep.subr.bf16.mxu0 0
    %846 = vmatpush2.bf16.msra.mxu0 0
    %847 = vmatprep.subr.bf16.mxu0 0
    %848 = vmatpush2.bf16.msra.mxu0 0
    %849 = vmatprep.subr.bf16.mxu0 0
    %850 = vmatpush2.bf16.msra.mxu0 0
    %851 = vmatprep.mubr.bf16.mxu0 0
    %852 = vmatmul.mubr.bf16.gmra.mxu0 %v817
    %v853 = vpop.f32.mrf.mxu0
    %v854 = vadd.f32 0.0, %v853
    %v855 = vpop.f32.mrf.mxu0
    %v856 = vpop.f32.mrf.mxu0
    %v857 = vpop.f32.mrf.mxu0
    %858 = vdwg.mxu0
    %v859 = vadd.f32 %v811, %v854
    %v860 = vxor.u32 %v859, 2147483648
    %v861 = vmul.f32 %v860, 1.442695
    %v862 = vpow.pop %v861
    %v863 = vadd.f32 %v862, 1.0
    %v864 = vrcp.pop %v863
    %v865 = vmul.f32 1.0, %v864
    %v866 = vadd.f32 %v854, %v291
    %868 = vrot.lane.b32.xlu0 %v866, 64
    %v869 = vpop.permute.xlu0 %868
    %v871 = vmul.f32 %v865, %v869
    %873 = vrot.lane.b32.xlu0 %v871, 64
    %v874 = vpop.permute.xlu0 %873
    %v876 = vadd.f32 %v811, %v874
    %v877 = vtanh.pop %v876
    %v878 = vsub.f32 1.0, %v865
    %880 = vrot.lane.b32.xlu0 %v877, 96
    %v881 = vpop.permute.xlu0 %880
    %v883 = vmul.f32 %v878, %v881
    %v884 = vmul.f32 %v865, %v803
    %v885 = vadd.f32 %v883, %v884
    %887 = vrot.lane.b32.xlu0 %v885, 96
    %v888 = vpop.permute.xlu0 %887
    %s890 = scalar_lea.vmem [#allocation3], 56
    %891 = vst.msk [vmem:[%s890] sm:$0xff] %vm234, %v888
    %v892 = vld [vmem:[#allocation3] sm:$0xff]
    %v893 = vld [vmem:[#allocation3 + $0x8] sm:$0xff]
    %v894 = vld [vmem:[#allocation3 + $0x10] sm:$0xff]
    %v895 = vld [vmem:[#allocation3 + $0x18] sm:$0xff]
    %v896 = vld [vmem:[#allocation3 + $0x20] sm:$0xff]
    %v897 = vld [vmem:[#allocation3 + $0x28] sm:$0xff]
    %v898 = vld [vmem:[#allocation3 + $0x30] sm:$0xff]
    %v899 = vld [vmem:[#allocation3 + $0x38] sm:$0xff]
    %v900 = vpack.c.bf16 %v893, %v892
    %v901 = vpack.c.bf16 %v895, %v894
    %v902 = vpack.c.bf16 %v897, %v896
    %v903 = vpack.c.bf16 %v899, %v898
    %v904 = vld [vmem:[#allocation10] sm:$0xf]
    %v905 = vld [vmem:[#allocation10 + $0x4] sm:$0xf]
    %v906 = vld [vmem:[#allocation10 + $0x8] sm:$0xf]
    %v907 = vld [vmem:[#allocation10 + $0xc] sm:$0xf]
    %v908 = vld [vmem:[%s6] sm:$0x1]
    %v910 = vlaneseq
    %v911 = vshrl.u32 %v910, 7
    %v912 = vsub.s32 0, %v911
    %v913 = vrot.slane %v908, %v912
    %v919 = vunpack.c.l.b16 %v904
    %v920 = vunpack.c.l.b16 %v905
    %v921 = vunpack.c.l.b16 %v906
    %v922 = vunpack.c.l.b16 %v907
    %v923 = vpack.c.b16 %v920, %v919
    %v924 = vpack.c.b16 %v922, %v921
    %v928 = vsel %vm234, %v900, 0
    %v931 = vsel %vm234, %v901, 0
    %v934 = vsel %vm234, %v902, 0
    %v937 = vsel %vm234, %v903, 0
    %939 = vmatprep.subr.bf16.mxu0 0
    %940 = vmatpush1.bf16.msra.mxu0 0
    %941 = vmatprep.subr.bf16.mxu0 0
    %942 = vmatpush1.bf16.msra.mxu0 0
    %943 = vmatprep.subr.bf16.mxu0 0
    %944 = vmatpush1.bf16.msra.mxu0 0
    %945 = vmatprep.subr.bf16.mxu0 0
    %946 = vmatpush1.bf16.msra.mxu0 0
    %947 = vmatprep.subr.bf16.mxu0 0
    %948 = vmatpush1.bf16.msra.mxu0 0
    %949 = vmatprep.subr.bf16.mxu0 0
    %950 = vmatpush1.bf16.msra.mxu0 0
    %951 = vmatprep.subr.bf16.mxu0 0
    %952 = vmatpush1.bf16.msra.mxu0 %v924
    %953 = vmatprep.subr.bf16.mxu0 0
    %954 = vmatpush1.bf16.msra.mxu0 %v923
    %955 = vmatprep.subr.bf16.mxu0 0
    %956 = vmatpush2.bf16.msra.mxu0 0
    %957 = vmatprep.subr.bf16.mxu0 0
    %958 = vmatpush2.bf16.msra.mxu0 0
    %959 = vmatprep.subr.bf16.mxu0 0
    %960 = vmatpush2.bf16.msra.mxu0 0
    %961 = vmatprep.subr.bf16.mxu0 0
    %962 = vmatpush2.bf16.msra.mxu0 0
    %963 = vmatprep.subr.bf16.mxu0 0
    %964 = vmatpush2.bf16.msra.mxu0 0
    %965 = vmatprep.subr.bf16.mxu0 0
    %966 = vmatpush2.bf16.msra.mxu0 0
    %967 = vmatprep.subr.bf16.mxu0 0
    %968 = vmatpush2.bf16.msra.mxu0 0
    %969 = vmatprep.subr.bf16.mxu0 0
    %970 = vmatpush2.bf16.msra.mxu0 0
    %971 = vmatprep.mubr.bf16.mxu0 0
    %972 = vmatmul.mubr.bf16.gmra.mxu0 %v928
    %v973 = vpop.f32.mrf.mxu0
    %v974 = vadd.f32 %v913, %v973
    %v975 = vpop.f32.mrf.mxu0
    %v976 = vpop.f32.mrf.mxu0
    %v977 = vadd.f32 %v913, %v976
    %v978 = vpop.f32.mrf.mxu0
    %979 = vmatprep.mubr.bf16.mxu0 0
    %980 = vmatmul.mubr.bf16.gmra.mxu0 %v931
    %v981 = vpop.f32.mrf.mxu0
    %v982 = vadd.f32 %v913, %v981
    %v983 = vpop.f32.mrf.mxu0
    %v984 = vpop.f32.mrf.mxu0
    %v985 = vadd.f32 %v913, %v984
    %v986 = vpop.f32.mrf.mxu0
    %987 = vmatprep.mubr.bf16.mxu0 0
    %988 = vmatmul.mubr.bf16.gmra.mxu0 %v934
    %v989 = vpop.f32.mrf.mxu0
    %v990 = vadd.f32 %v913, %v989
    %v991 = vpop.f32.mrf.mxu0
    %v992 = vpop.f32.mrf.mxu0
    %v993 = vadd.f32 %v913, %v992
    %v994 = vpop.f32.mrf.mxu0
    %995 = vmatprep.mubr.bf16.mxu0 0
    %996 = vmatmul.mubr.bf16.gmra.mxu0 %v937
    %v997 = vpop.f32.mrf.mxu0
    %v998 = vadd.f32 %v913, %v997
    %v999 = vpop.f32.mrf.mxu0
    %v1000 = vpop.f32.mrf.mxu0
    %v1001 = vadd.f32 %v913, %v1000
    %v1002 = vpop.f32.mrf.mxu0
    %1003 = vdwg.mxu0
    %1004 = vmax.xlane.f32.xlu0 %v974
    %v1005 = vpop.xlane.xlu0 %1004
    %1006 = vmax.xlane.f32.xlu0 %v977
    %v1007 = vpop.xlane.xlu0 %1006
    %1008 = vmax.xlane.f32.xlu0 %v982
    %v1009 = vpop.xlane.xlu0 %1008
    %1010 = vmax.xlane.f32.xlu0 %v985
    %v1011 = vpop.xlane.xlu0 %1010
    %1012 = vmax.xlane.f32.xlu0 %v990
    %v1013 = vpop.xlane.xlu0 %1012
    %1014 = vmax.xlane.f32.xlu0 %v993
    %v1015 = vpop.xlane.xlu0 %1014
    %1016 = vmax.xlane.f32.xlu0 %v998
    %v1017 = vpop.xlane.xlu0 %1016
    %1018 = vmax.xlane.f32.xlu0 %v1001
    %v1019 = vpop.xlane.xlu0 %1018
    %v1020 = vsub.f32 %v974, %v1005
    %v1021 = vsub.f32 %v977, %v1007
    %v1022 = vsub.f32 %v982, %v1009
    %v1023 = vsub.f32 %v985, %v1011
    %v1024 = vsub.f32 %v990, %v1013
    %v1025 = vsub.f32 %v993, %v1015
    %v1026 = vsub.f32 %v998, %v1017
    %v1027 = vsub.f32 %v1001, %v1019
    %v1028 = vmul.f32 %v1020, 1.442695
    %v1029 = vpow.pop %v1028
    %v1030 = vmul.f32 %v1021, 1.442695
    %v1031 = vpow.pop %v1030
    %v1032 = vmul.f32 %v1022, 1.442695
    %v1033 = vpow.pop %v1032
    %v1034 = vmul.f32 %v1023, 1.442695
    %v1035 = vpow.pop %v1034
    %v1036 = vmul.f32 %v1024, 1.442695
    %v1037 = vpow.pop %v1036
    %v1038 = vmul.f32 %v1025, 1.442695
    %v1039 = vpow.pop %v1038
    %v1040 = vmul.f32 %v1026, 1.442695
    %v1041 = vpow.pop %v1040
    %v1042 = vmul.f32 %v1027, 1.442695
    %v1043 = vpow.pop %v1042
    %1044 = vadd.xlane.f32.xlu0 %v1029
    %v1045 = vpop.xlane.xlu0 %1044
    %1046 = vadd.xlane.f32.xlu0 %v1031
    %v1047 = vpop.xlane.xlu0 %1046
    %1048 = vadd.xlane.f32.xlu0 %v1033
    %v1049 = vpop.xlane.xlu0 %1048
    %1050 = vadd.xlane.f32.xlu0 %v1035
    %v1051 = vpop.xlane.xlu0 %1050
    %1052 = vadd.xlane.f32.xlu0 %v1037
    %v1053 = vpop.xlane.xlu0 %1052
    %1054 = vadd.xlane.f32.xlu0 %v1039
    %v1055 = vpop.xlane.xlu0 %1054
    %1056 = vadd.xlane.f32.xlu0 %v1041
    %v1057 = vpop.xlane.xlu0 %1056
    %1058 = vadd.xlane.f32.xlu0 %v1043
    %v1059 = vpop.xlane.xlu0 %1058
    %v1060 = vlog2.pop %v1045
    %v1061 = vmul.f32 %v1060, 0.6931472
    %v1062 = vlog2.pop %v1047
    %v1063 = vmul.f32 %v1062, 0.6931472
    %v1064 = vlog2.pop %v1049
    %v1065 = vmul.f32 %v1064, 0.6931472
    %v1066 = vlog2.pop %v1051
    %v1067 = vmul.f32 %v1066, 0.6931472
    %v1068 = vlog2.pop %v1053
    %v1069 = vmul.f32 %v1068, 0.6931472
    %v1070 = vlog2.pop %v1055
    %v1071 = vmul.f32 %v1070, 0.6931472
    %v1072 = vlog2.pop %v1057
    %v1073 = vmul.f32 %v1072, 0.6931472
    %v1074 = vlog2.pop %v1059
    %v1075 = vmul.f32 %v1074, 0.6931472
    %v1076 = vsub.f32 %v1020, %v1061
    %v1077 = vsub.f32 %v1021, %v1063
    %v1078 = vsub.f32 %v1022, %v1065
    %v1079 = vsub.f32 %v1023, %v1067
    %v1080 = vsub.f32 %v1024, %v1069
    %v1081 = vsub.f32 %v1025, %v1071
    %v1082 = vsub.f32 %v1026, %v1073
    %v1083 = vsub.f32 %v1027, %v1075
    %1084 = vst [vmem:[#allocation12] sm:$0xff] %v1076
    %1085 = vst [vmem:[#allocation12 + $0x8] sm:$0xff] %v1077
    %1086 = vst [vmem:[#allocation12 + $0x10] sm:$0xff] %v1078
    %1087 = vst [vmem:[#allocation12 + $0x18] sm:$0xff] %v1079
    %1088 = vst [vmem:[#allocation12 + $0x20] sm:$0xff] %v1080
    %1089 = vst [vmem:[#allocation12 + $0x28] sm:$0xff] %v1081
    %1090 = vst [vmem:[#allocation12 + $0x30] sm:$0xff] %v1082
    %1091 = vst [vmem:[#allocation12 + $0x38] sm:$0xff] %v1083
    // Predicated region
    $region46: #{tpu_custom_call.1} parent=1 // pred_check
      _
    $region47: #{tpu_custom_call.1} parent=1 // pred_check_branch
      %1093 = sbr.rel (0) target = $region49
    $region48: #{tpu_custom_call.1} parent=1 // pred_region
      %s1095 = ssub.s32 1024, 1024
      %1096 = vsyncadd [#allocation6], %s1095
      %s1097 = sshll.u32 [#allocation12], 4
      %s1098 = int_to_ptr.vmem [resolvable:$true] %s1097
      %1103 = dma.vmem_to_hbm [thread:$0]  %s1098, 1024, %s7, [#allocation6], 128, 128, 8
    $region49: #{tpu_custom_call.1} parent=1 // pred_fallthru
      _
    // Predicated region
    $region50: #{tpu_custom_call.1} parent=1 // pred_check
      _
    $region51: #{tpu_custom_call.1} parent=1 // pred_check_branch
      %1105 = sbr.rel (0) target = $region53
    $region52: #{tpu_custom_call.1} parent=1 // pred_region
      %1106 = dma.done [#allocation6], 1024
    $region53: #{tpu_custom_call.1} parent=1 // pred_fallthru
      _
    %1107 = vsyncpa [#allocation5], 1
    %1108 = vsyncpa [#allocation8], 1
    %1109 = vsyncpa [#allocation11], 1
    %1110 = vsyncpa [#allocation6], 1

</llo_original>
